<compile_context>
chip_gen: v5e
topology: v5e:2x2
jax: 0.10.0
libtpu: 0.0.40
codegen_flags: <defaults>
</compile_context>

<pallas_src>
import functools

import jax
import jax.numpy as jnp
import numpy as np
from jax import lax
from jax.experimental import pallas as pl
from jax.experimental.pallas import tpu as pltpu


def _vq_kernel(x_ref, e_ref, e2_ref, q_ref, idx_ref, sse_ref):
    x = x_ref[...]                                   # (tm, D), input dtype
    e = e_ref[...]                                   # (K, D), codebook dtype
    e2 = e2_ref[...]                                 # (1, K), f32 (hoisted)
    tm = x.shape[0]
    K = e.shape[0]

    xf = x.astype(jnp.float32)
    x2 = jnp.sum(xf * xf, axis=1, keepdims=True)     # (tm, 1) f32

    # Contract dim 1 of both operands: no in-kernel transpose of the codebook.
    xe = lax.dot_general(x, e, (((1,), (1,)), ((), ())),
                         preferred_element_type=jnp.float32)        # (tm, K)
    dist = x2 + e2 - 2.0 * xe                                        # (tm, K) f32

    idx = jnp.argmin(dist, axis=1).astype(jnp.int32)                 # (tm,)
    idx_ref[...] = idx[None, :]                                      # lane-dense (1, tm)

    # ||x - e_idx||^2 is exactly the distance at the argmin; clamp at 0 to
    # guard against catastrophic cancellation in the expanded form.
    sse_ref[...] = jnp.maximum(jnp.min(dist, axis=1), 0.0)[None, :]  # (1, tm)

    # one-hot @ embedding, exactly what the reference does (second MXU pass).
    # TODO(synk): for very large K a row-gather of the VMEM-resident codebook
    # would scale with tm*D instead of tm*K*D.
    onehot = (lax.broadcasted_iota(jnp.int32, (tm, K), 1)
              == idx[:, None]).astype(e.dtype)                       # (tm, K)
    q_ref[...] = jnp.dot(onehot, e,
                         preferred_element_type=jnp.float32).astype(q_ref.dtype)


@functools.partial(jax.jit, static_argnames=("commitment_cost", "tm"))
def vector_quantizer_forward(x_nchw, embedding, commitment_cost=0.25, tm=256):
    """Pallas implementation of VectorQuantizer.forward.

    Args:
      x_nchw:    (N, C, H, W) float input (C == embedding_dim).
      embedding: (num_embeddings, embedding_dim) codebook.
    Returns:
      quantized (N, C, H, W), loss (scalar), encoding_indices (N*H*W, 1) int32.
    """
    N, C, H, W = x_nchw.shape
    K, D = embedding.shape
    assert C == D, "channel dim must equal embedding_dim"

    # NCHW -> NHWC -> (M, D)   (glue, plain JAX)
    x_nhwc = jnp.transpose(x_nchw, (0, 2, 3, 1))
    flat = x_nhwc.reshape(-1, D)
    M = flat.shape[0]

    # Pad the row count up to a multiple of the tile; padded rows are sliced
    # off the outputs and excluded from the loss sum.
    num_tiles = -(-M // tm)
    M_pad = num_tiles * tm
    if M_pad != M:
        flat = jnp.pad(flat, ((0, M_pad - M), (0, 0)))

    # Grid-invariant codebook norm, computed once (hoisted out of the kernel).
    e2 = jnp.sum(embedding.astype(jnp.float32) ** 2, axis=1)[None, :]   # (1, K)

    q_flat, idx_row, sse_row = pl.pallas_call(
        _vq_kernel,
        out_shape=(
            jax.ShapeDtypeStruct((M_pad, D), x_nchw.dtype),
            jax.ShapeDtypeStruct((1, M_pad), jnp.int32),
            jax.ShapeDtypeStruct((1, M_pad), jnp.float32),
        ),
        grid_spec=pltpu.PrefetchScalarGridSpec(
            num_scalar_prefetch=0,
            grid=(num_tiles,),
            in_specs=[
                pl.BlockSpec((tm, D), lambda i: (i, 0)),    # input row tile
                pl.BlockSpec((K, D), lambda i: (0, 0)),     # codebook (grid-invariant)
                pl.BlockSpec((1, K), lambda i: (0, 0)),     # hoisted ||e||^2
            ],
            out_specs=[
                pl.BlockSpec((tm, D), lambda i: (i, 0)),    # quantized row tile
                pl.BlockSpec((1, tm), lambda i: (0, i)),    # indices, lane-dense
                pl.BlockSpec((1, tm), lambda i: (0, i)),    # per-row SSE, lane-dense
            ],
        ),
        compiler_params=pltpu.CompilerParams(
            dimension_semantics=("parallel",)),
    )(flat, embedding, e2)

    # loss = q_latent + commitment_cost * e_latent ; both equal mse fwd-value-wise.
    row_sse = sse_row[0, :M]
    mse = jnp.sum(row_sse) / (M * D)
    loss = (1.0 + commitment_cost) * mse

    # straight-through forward value == quantized ; back to NCHW.
    quantized = jnp.transpose(q_flat[:M].reshape(N, H, W, D), (0, 3, 1, 2))
    idx = idx_row[0, :M][:, None]
    # TODO(synk): reference returns int64 indices; JAX default x64 is off -> int32.
    # TODO(synk): forward-only; detach()/straight-through gradient semantics would
    # need a custom VJP, not expressible in this forward kernel alone.
    return quantized, loss, idx


def _reference(x_nchw, embedding, commitment_cost=0.25):
    """Plain-JAX reference mirroring the PyTorch forward."""
    x = jnp.transpose(x_nchw, (0, 2, 3, 1))
    shp = x.shape
    D = embedding.shape[1]
    flat = x.reshape(-1, D)
    dist = (jnp.sum(flat ** 2, axis=1, keepdims=True)
            + jnp.sum(embedding ** 2, axis=1)
            - 2.0 * flat @ embedding.T)
    idx = jnp.argmin(dist, axis=1)
    q = embedding[idx].reshape(shp)
    e_loss = jnp.mean((q - x) ** 2)
    q_loss = jnp.mean((q - x) ** 2)
    loss = q_loss + commitment_cost * e_loss
    return jnp.transpose(q, (0, 3, 1, 2)), loss, idx[:, None]


if __name__ == "__main__":
    num_embeddings = 64
    embedding_dim = 32
    N, H, W = 2, 16, 16          # M = N*H*W = 512 rows -> 2 tiles of 256

    key = jax.random.PRNGKey(0)
    k_x, k_e = jax.random.split(key)
    x = jax.random.normal(k_x, (N, embedding_dim, H, W), dtype=jnp.float32)
    # nn.Embedding weight init: uniform(-1/K, 1/K)
    embedding = jax.random.uniform(
        k_e, (num_embeddings, embedding_dim), dtype=jnp.float32,
        minval=-1.0 / num_embeddings, maxval=1.0 / num_embeddings)

    quantized, loss, indices = vector_quantizer_forward(x, embedding)
    jax.block_until_ready((quantized, loss, indices))

    q_ref, loss_ref, idx_ref = _reference(x, embedding)
    np.testing.assert_allclose(np.asarray(quantized), np.asarray(q_ref),
                               rtol=1e-5, atol=1e-5)
    np.testing.assert_allclose(np.asarray(loss), np.asarray(loss_ref),
                               rtol=1e-5, atol=1e-5)
    np.testing.assert_array_equal(np.asarray(indices), np.asarray(idx_ref))

    print("KERNEL_OK")
</pallas_src>

<mosaic_0001>
module attributes {stable_mosaic.version = 11 : i64} {
  func.func @_vq_kernel(%arg0: i32, %arg1: memref<256x32xf32, #tpu.memory_space<vmem>>, %arg2: memref<64x32xf32, #tpu.memory_space<vmem>>, %arg3: memref<1x64xf32, #tpu.memory_space<vmem>>, %arg4: memref<256x32xf32, #tpu.memory_space<vmem>>, %arg5: memref<1x256xi32, #tpu.memory_space<vmem>>, %arg6: memref<1x256xf32, #tpu.memory_space<vmem>>) attributes {dimension_semantics = [#tpu.dimension_semantics<parallel>], iteration_bounds = array<i64: 2>, scalar_prefetch = 0 : i64, scratch_operands = 0 : i64, tpu.core_type = #tpu.core_type<tc>, window_params = [{transform_indices = @transform_0, window_bounds = array<i64: 256, 32>}, {pipeline_mode = #tpu.pipeline_mode<synchronous>, transform_indices = @transform_1, window_bounds = array<i64: 64, 32>}, {pipeline_mode = #tpu.pipeline_mode<synchronous>, transform_indices = @transform_2, window_bounds = array<i64: 1, 64>}, {transform_indices = @transform_3, window_bounds = array<i64: 256, 32>}, {transform_indices = @transform_4, window_bounds = array<i64: 1, 256>}, {transform_indices = @transform_5, window_bounds = array<i64: 1, 256>}]} {
    %c0 = arith.constant 0 : index
    %c0_0 = arith.constant 0 : index
    %0 = vector.load %arg1[%c0, %c0_0] : memref<256x32xf32, #tpu.memory_space<vmem>>, vector<256x32xf32>
    %c0_1 = arith.constant 0 : index
    %c0_2 = arith.constant 0 : index
    %1 = vector.load %arg2[%c0_1, %c0_2] : memref<64x32xf32, #tpu.memory_space<vmem>>, vector<64x32xf32>
    %c0_3 = arith.constant 0 : index
    %c0_4 = arith.constant 0 : index
    %2 = vector.load %arg3[%c0_3, %c0_4] : memref<1x64xf32, #tpu.memory_space<vmem>>, vector<1x64xf32>
    %3 = arith.mulf %0, %0 : vector<256x32xf32>
    %cst = arith.constant dense<0.000000e+00> : vector<256xf32>
    %4 = vector.multi_reduction <add>, %3, %cst [1] : vector<256x32xf32> to vector<256xf32>
    %5 = vector.shape_cast %4 : vector<256xf32> to vector<256x1xf32>
    %cst_5 = arith.constant dense<0.000000e+00> : vector<256x64xf32>
    %6 = tpu.matmul %0, %1, %cst_5 {dimension_numbers = #tpu.dot_dimension_numbers<[1], [1], [0], [0], [0, 0, 1, 0], [], []>} : vector<256x32xf32>, vector<64x32xf32>, vector<256x64xf32> -> vector<256x64xf32>
    %7 = vector.broadcast %5 : vector<256x1xf32> to vector<256x64xf32>
    %8 = vector.broadcast %2 : vector<1x64xf32> to vector<256x64xf32>
    %9 = arith.addf %7, %8 : vector<256x64xf32>
    %cst_6 = arith.constant 2.000000e+00 : f32
    %10 = vector.broadcast %cst_6 : f32 to vector<256x64xf32>
    %11 = arith.mulf %10, %6 : vector<256x64xf32>
    %12 = arith.subf %9, %11 : vector<256x64xf32>
    %13 = tpu.reduce_index %12 {axis = 1 : i32, kind = #tpu.reduction_kind<arg_min>} : vector<256x64xf32> -> vector<256xi32>
    %14 = vector.shape_cast %13 : vector<256xi32> to vector<1x256xi32>
    %c0_7 = arith.constant 0 : index
    %c0_8 = arith.constant 0 : index
    %15 = vector.load %arg5[%c0_7, %c0_8] : memref<1x256xi32, #tpu.memory_space<vmem>>, vector<1x256xi32>
    tpu.vector_store %arg5[%c0_7, %c0_8], %14 {strides = array<i32>} : memref<1x256xi32, #tpu.memory_space<vmem>>, vector<1x256xi32>,
    %cst_9 = arith.constant dense<0x7F800000> : vector<256xf32>
    %16 = vector.multi_reduction <minimumf>, %12, %cst_9 [1] : vector<256x64xf32> to vector<256xf32>
    %cst_10 = arith.constant 0.000000e+00 : f32
    %17 = vector.broadcast %cst_10 : f32 to vector<256xf32>
    %18 = arith.maximumf %16, %17 : vector<256xf32>
    %19 = vector.shape_cast %18 : vector<256xf32> to vector<1x256xf32>
    %c0_11 = arith.constant 0 : index
    %c0_12 = arith.constant 0 : index
    %20 = vector.load %arg6[%c0_11, %c0_12] : memref<1x256xf32, #tpu.memory_space<vmem>>, vector<1x256xf32>
    tpu.vector_store %arg6[%c0_11, %c0_12], %19 {strides = array<i32>} : memref<1x256xf32, #tpu.memory_space<vmem>>, vector<1x256xf32>,
    %21 = tpu.iota {dimensions = array<i32: 1>} : vector<256x64xi32>
    %22 = vector.shape_cast %13 : vector<256xi32> to vector<256x1xi32>
    %23 = vector.broadcast %22 : vector<256x1xi32> to vector<256x64xi32>
    %24 = arith.cmpi eq, %21, %23 : vector<256x64xi32>
    %25 = arith.extui %24 : vector<256x64xi1> to vector<256x64xi32>
    %26 = arith.sitofp %25 : vector<256x64xi32> to vector<256x64xf32>
    %cst_13 = arith.constant dense<0.000000e+00> : vector<256x32xf32>
    %27 = tpu.matmul %26, %1, %cst_13 {dimension_numbers = #tpu.dot_dimension_numbers<[1], [0], [0], [1], [0, 0, 1, 1], [], []>} : vector<256x64xf32>, vector<64x32xf32>, vector<256x32xf32> -> vector<256x32xf32>
    %c0_14 = arith.constant 0 : index
    %c0_15 = arith.constant 0 : index
    %28 = vector.load %arg4[%c0_14, %c0_15] : memref<256x32xf32, #tpu.memory_space<vmem>>, vector<256x32xf32>
    tpu.vector_store %arg4[%c0_14, %c0_15], %27 {strides = array<i32>} : memref<256x32xf32, #tpu.memory_space<vmem>>, vector<256x32xf32>,
    return
  }
  func.func @transform_0(%arg0: i32) -> (i32, i32) {
    %c0_i32 = arith.constant 0 : i32
    %c0_i32_0 = arith.constant 0 : i32
    return %arg0, %c0_i32 : i32, i32
  }
  func.func @transform_1(%arg0: i32) -> (i32, i32) {
    %c0_i32 = arith.constant 0 : i32
    %c0_i32_0 = arith.constant 0 : i32
    %c0_i32_1 = arith.constant 0 : i32
    return %c0_i32, %c0_i32_0 : i32, i32
  }
  func.func @transform_2(%arg0: i32) -> (i32, i32) {
    %c0_i32 = arith.constant 0 : i32
    %c0_i32_0 = arith.constant 0 : i32
    %c0_i32_1 = arith.constant 0 : i32
    return %c0_i32, %c0_i32_0 : i32, i32
  }
  func.func @transform_3(%arg0: i32) -> (i32, i32) {
    %c0_i32 = arith.constant 0 : i32
    %c0_i32_0 = arith.constant 0 : i32
    return %arg0, %c0_i32 : i32, i32
  }
  func.func @transform_4(%arg0: i32) -> (i32, i32) {
    %c0_i32 = arith.constant 0 : i32
    %c0_i32_0 = arith.constant 0 : i32
    return %c0_i32, %arg0 : i32, i32
  }
  func.func @transform_5(%arg0: i32) -> (i32, i32) {
    %c0_i32 = arith.constant 0 : i32
    %c0_i32_0 = arith.constant 0 : i32
    return %c0_i32, %arg0 : i32, i32
  }
}

</mosaic_0001>

<llo_original>
// kernel: vector_quantizer_forward.1
$region0: #{vector_quantizer_forward.1}
  #allocation0 [shape = 'u32[]', space=smem, size = 0x4, offset = 0x4, fixed_abs, tag = 'smem constant byte address 0x4 - core index']
  #allocation1 [shape = 'u32[72,128]{1,0:T(1,128)}', space=vmem, size = 0x9000, scoped, tag = 'internal scratch']
  %s0 = inlined_call_operand.hbm [shape: f32[512,32], index: 0, kind: input, shape index: {}]
  %s1 = inlined_call_operand.vmem [shape: f32[64,32], index: 1, kind: input, shape index: {}]
  %s2 = inlined_call_operand.vmem [shape: f32[1,64], index: 2, kind: input, shape index: {}]
  %s3 = inlined_call_operand.hbm [shape: f32[512,32], index: 3, kind: output, shape index: {0}]
  %s4 = inlined_call_operand.hbm [shape: s32[1,512], index: 4, kind: output, shape index: {1}]
  %s5 = inlined_call_operand.vmem [shape: f32[1,512], index: 5, kind: output, shape index: {2}]
  %6 = xla_tuple %s3, %s4, %s5
  %s7 = sld [smem:[#allocation0]]
  $region65: #{vector_quantizer_forward.1} parent=0
    _
  %s9 = ssub.s32 1, %s7
  %s10 = scalar_select 0, %s9, %s7
  $region1: #{vector_quantizer_forward.1} parent=0
    #allocation2 [shape = 'u8[262144]{0}', space=vmem, size = 0x40000, scoped, tag = 'input window, operand 0']
    #allocation3 [shape = 's32[2]{0}', space=sflag, size = 0x8, scoped, tag = 'scoped memory for vector_quantizer_forward.1']
    #allocation4 [shape = 's32[2]{0}', space=sflag, size = 0x8, scoped, tag = 'scoped memory for vector_quantizer_forward.1']
    #allocation5 [shape = 'u8[262144]{0}', space=vmem, size = 0x40000, scoped, tag = 'output window, operand 0']
    #allocation6 [shape = 'u8[2048]{0}', space=vmem, size = 0x800, scoped, tag = 'output window, operand 1']
    #allocation7 [shape = 's32[2]{0}', space=sflag, size = 0x8, scoped, tag = 'scoped memory for vector_quantizer_forward.1']
    %11 = vsyncpa [#allocation3], 0
    %s12 = scalar_lea.sflag [#allocation3], 1
    %13 = vsyncpa %s12, 0
    %14 = vsyncpa [#allocation4], 0
    %s15 = scalar_lea.sflag [#allocation4], 1
    %16 = vsyncpa %s15, 0
    %17 = vsyncpa [#allocation7], 0
    %s18 = scalar_lea.sflag [#allocation7], 1
    %19 = vsyncpa %s18, 0
    loop: start=0, step=1, limit=4
    $region2: #{vector_quantizer_forward.1} parent=1 // loop_pre_header
      _
    $region3: #{vector_quantizer_forward.1} parent=1 // loop_header
      %s21 = sphi 0, %s25
      %p22 = scmp.ge.s32.totalorder %s21, 4
      %s31 = sphi 0, %s33
      %s34 = sphi 0, %s31
      %s35 = sphi 0, %s34
      %s51 = sphi 0, %s35
      %s55 = sphi 0, %s55
      %s57 = sphi 0, %s55
      %s58 = sphi 0, %s57
      %s72 = sphi 0, %s58
      %s76 = sphi 0, %s76
      %s78 = sphi 0, %s76
      %s79 = sphi 0, %s78
      %s93 = sphi 0, %s79
      %s99 = sphi 0, %s101
      %s102 = sphi 0, %s99
      %s103 = sphi 0, %s102
      %s119 = sphi 0, %s103
      %s125 = sphi 0, %s127
      %s128 = sphi 0, %s125
      %s129 = sphi 0, %s128
      %s145 = sphi 0, %s129
      %s151 = sphi 0, %s153
      %s154 = sphi 0, %s151
      %s155 = sphi 0, %s154
      %s171 = sphi 0, %s155
    $region4: #{vector_quantizer_forward.1} parent=1 // loop_header_branch
      %24 = sbr.rel (%p22) target = $region8
    $region5: #{vector_quantizer_forward.1} parent=1 // loop_body
      %s26 = ssub.s32 %s21, 1
      %s27 = ssub.s32 %s21, 2
      %s28 = sadd.s32 %s21, 1
      %s29 = ssub.s32 %s21, %s28
      %p30 = scmp.eq.s32.totalorder %s29, 0
      %s32 = sadd.s32 %s31, 1
      %s33 = scalar_select %p30, %s31, %s32
      %p36 = pneg %p30
      %p37 = scmp.eq.s32.totalorder %s21, 1
      %p38 = por %p36, %p37
      %p39 = scmp.ne.s32.totalorder %s31, %s34
      %p40 = scmp.eq.s32.totalorder %s21, 0
      %p41 = por %p39, %p40
      %p42 = scmp.ne.s32.totalorder %s31, %s34
      %p43 = scmp.eq.s32.totalorder %s26, 1
      %p44 = por %p42, %p43
      %p45 = scmp.ne.s32.totalorder %s34, %s35
      %p46 = scmp.eq.s32.totalorder %s26, 0
      %p47 = por %p45, %p46
      %p48 = scmp.ne.s32.totalorder %s34, %s35
      %p49 = scmp.eq.s32.totalorder %s27, 1
      %p50 = por %p48, %p49
      %p52 = scmp.ne.s32.totalorder %s35, %s51
      %p53 = scmp.eq.s32.totalorder %s27, 0
      %p54 = por %p52, %p53
      %s56 = sadd.s32 %s55, 1
      %p59 = scmp.eq.s32.totalorder %s21, 1
      %p60 = scmp.ne.s32.totalorder %s55, %s57
      %p61 = scmp.eq.s32.totalorder %s21, 0
      %p62 = por %p60, %p61
      %p63 = scmp.ne.s32.totalorder %s55, %s57
      %p64 = scmp.eq.s32.totalorder %s26, 1
      %p65 = por %p63, %p64
      %p66 = scmp.ne.s32.totalorder %s57, %s58
      %p67 = scmp.eq.s32.totalorder %s26, 0
      %p68 = por %p66, %p67
      %p69 = scmp.ne.s32.totalorder %s57, %s58
      %p70 = scmp.eq.s32.totalorder %s27, 1
      %p71 = por %p69, %p70
      %p73 = scmp.ne.s32.totalorder %s58, %s72
      %p74 = scmp.eq.s32.totalorder %s27, 0
      %p75 = por %p73, %p74
      %s77 = sadd.s32 %s76, 1
      %p80 = scmp.eq.s32.totalorder %s21, 1
      %p81 = scmp.ne.s32.totalorder %s76, %s78
      %p82 = scmp.eq.s32.totalorder %s21, 0
      %p83 = por %p81, %p82
      %p84 = scmp.ne.s32.totalorder %s76, %s78
      %p85 = scmp.eq.s32.totalorder %s26, 1
      %p86 = por %p84, %p85
      %p87 = scmp.ne.s32.totalorder %s78, %s79
      %p88 = scmp.eq.s32.totalorder %s26, 0
      %p89 = por %p87, %p88
      %p90 = scmp.ne.s32.totalorder %s78, %s79
      %p91 = scmp.eq.s32.totalorder %s27, 1
      %p92 = por %p90, %p91
      %p94 = scmp.ne.s32.totalorder %s79, %s93
      %p95 = scmp.eq.s32.totalorder %s27, 0
      %p96 = por %p94, %p95
      %s97 = ssub.s32 %s21, %s28
      %p98 = scmp.eq.s32.totalorder %s97, 0
      %s100 = sadd.s32 %s99, 1
      %s101 = scalar_select %p98, %s99, %s100
      %p104 = pneg %p98
      %p105 = scmp.eq.s32.totalorder %s21, 1
      %p106 = por %p104, %p105
      %p107 = scmp.ne.s32.totalorder %s99, %s102
      %p108 = scmp.eq.s32.totalorder %s21, 0
      %p109 = por %p107, %p108
      %p110 = scmp.ne.s32.totalorder %s99, %s102
      %p111 = scmp.eq.s32.totalorder %s26, 1
      %p112 = por %p110, %p111
      %p113 = scmp.ne.s32.totalorder %s102, %s103
      %p114 = scmp.eq.s32.totalorder %s26, 0
      %p115 = por %p113, %p114
      %p116 = scmp.ne.s32.totalorder %s102, %s103
      %p117 = scmp.eq.s32.totalorder %s27, 1
      %p118 = por %p116, %p117
      %p120 = scmp.ne.s32.totalorder %s103, %s119
      %p121 = scmp.eq.s32.totalorder %s27, 0
      %p122 = por %p120, %p121
      %s123 = ssub.s32 %s21, %s28
      %p124 = scmp.eq.s32.totalorder %s123, 0
      %s126 = sadd.s32 %s125, 1
      %s127 = scalar_select %p124, %s125, %s126
      %p130 = pneg %p124
      %p131 = scmp.eq.s32.totalorder %s21, 1
      %p132 = por %p130, %p131
      %p133 = scmp.ne.s32.totalorder %s125, %s128
      %p134 = scmp.eq.s32.totalorder %s21, 0
      %p135 = por %p133, %p134
      %p136 = scmp.ne.s32.totalorder %s125, %s128
      %p137 = scmp.eq.s32.totalorder %s26, 1
      %p138 = por %p136, %p137
      %p139 = scmp.ne.s32.totalorder %s128, %s129
      %p140 = scmp.eq.s32.totalorder %s26, 0
      %p141 = por %p139, %p140
      %p142 = scmp.ne.s32.totalorder %s128, %s129
      %p143 = scmp.eq.s32.totalorder %s27, 1
      %p144 = por %p142, %p143
      %p146 = scmp.ne.s32.totalorder %s129, %s145
      %p147 = scmp.eq.s32.totalorder %s27, 0
      %p148 = por %p146, %p147
      %s149 = ssub.s32 %s21, %s28
      %p150 = scmp.eq.s32.totalorder %s149, 0
      %s152 = sadd.s32 %s151, 1
      %s153 = scalar_select %p150, %s151, %s152
      %p156 = pneg %p150
      %p157 = scmp.eq.s32.totalorder %s21, 1
      %p158 = por %p156, %p157
      %p159 = scmp.ne.s32.totalorder %s151, %s154
      %p160 = scmp.eq.s32.totalorder %s21, 0
      %p161 = por %p159, %p160
      %p162 = scmp.ne.s32.totalorder %s151, %s154
      %p163 = scmp.eq.s32.totalorder %s26, 1
      %p164 = por %p162, %p163
      %p165 = scmp.ne.s32.totalorder %s154, %s155
      %p166 = scmp.eq.s32.totalorder %s26, 0
      %p167 = por %p165, %p166
      %p168 = scmp.ne.s32.totalorder %s154, %s155
      %p169 = scmp.eq.s32.totalorder %s27, 1
      %p170 = por %p168, %p169
      %p172 = scmp.ne.s32.totalorder %s155, %s171
      %p173 = scmp.eq.s32.totalorder %s27, 0
      %p174 = por %p172, %p173
      %p175 = scmp.le.s32.totalorder 1, %s21
      %p176 = scmp.lt.s32.totalorder %s21, 3
      %p177 = pnand %p175, %p176
      %p178 = pneg %p177
      // Predicated region
      $region9: #{vector_quantizer_forward.1} parent=5 // pred_check
        _
      $region10: #{vector_quantizer_forward.1} parent=5 // pred_check_branch
        %180 = sbr.rel (%p177) target = $region12
      $region11: #{vector_quantizer_forward.1} parent=5 // pred_region
        %s181 = ssub.s32 %s21, 1
        // Predicated region
        $region13: #{vector_quantizer_forward.1} parent=11 // pred_check
          %p182 = pneg %p68
        $region14: #{vector_quantizer_forward.1} parent=11 // pred_check_branch
          %184 = sbr.rel (%p182) target = $region16
        $region15: #{vector_quantizer_forward.1} parent=11 // pred_region
          _
        $region16: #{vector_quantizer_forward.1} parent=11 // pred_fallthru
          _
        // Predicated region
        $region17: #{vector_quantizer_forward.1} parent=11 // pred_check
          %p185 = pneg %p89
        $region18: #{vector_quantizer_forward.1} parent=11 // pred_check_branch
          %187 = sbr.rel (%p185) target = $region20
        $region19: #{vector_quantizer_forward.1} parent=11 // pred_region
          _
        $region20: #{vector_quantizer_forward.1} parent=11 // pred_fallthru
          _
      $region12: #{vector_quantizer_forward.1} parent=5 // pred_fallthru
        _
      %p188 = scmp.lt.s32.totalorder %s21, 2
      // Predicated region
      $region21: #{vector_quantizer_forward.1} parent=5 // pred_check
        %p189 = pneg %p188
      $region22: #{vector_quantizer_forward.1} parent=5 // pred_check_branch
        %191 = sbr.rel (%p189) target = $region24
      $region23: #{vector_quantizer_forward.1} parent=5 // pred_region
        // Predicated region
        $region25: #{vector_quantizer_forward.1} parent=23 // pred_check
          %p192 = pneg %p41
        $region26: #{vector_quantizer_forward.1} parent=23 // pred_check_branch
          %194 = sbr.rel (%p192) target = $region28
        $region27: #{vector_quantizer_forward.1} parent=23 // pred_region
          %s195 = sand.u32 %s31, 1
          %s196 = scalar_lea.sflag [#allocation3], %s195
          %s197 = sand.u32 %s31, 1
          %s198 = smul.addr %s197, 256
          %s199 = scalar_lea.vmem [#allocation2], %s198
          %s200 = smul.u32 32, %s21
          %202 = vsyncadd %s196, 0
          %s203 = smul.addr %s200, 8
          %s204 = scalar_lea.hbm %s0, %s203
          %s205 = sshll.u32 %s204, 4
          %s206 = int_to_ptr.hbm [resolvable:$true] %s205
          %s207 = sshll.u32 %s199, 4
          %s208 = int_to_ptr.vmem [resolvable:$true] %s207
          %213 = dma.hbm_to_vmem [thread:$0]  %s206, 4096, %s208, %s196, 128, 128, 8
        $region28: #{vector_quantizer_forward.1} parent=23 // pred_fallthru
          _
      $region24: #{vector_quantizer_forward.1} parent=5 // pred_fallthru
        _
      %p214 = scmp.le.s32.totalorder 1, %s21
      %p215 = scmp.lt.s32.totalorder %s21, 3
      %p216 = pnand %p214, %p215
      %p217 = pneg %p216
      // Predicated region
      $region29: #{vector_quantizer_forward.1} parent=5 // pred_check
        _
      $region30: #{vector_quantizer_forward.1} parent=5 // pred_check_branch
        %219 = sbr.rel (%p216) target = $region32
      $region31: #{vector_quantizer_forward.1} parent=5 // pred_region
        %s220 = ssub.s32 %s21, 1
        %s221 = sand.u32 %s34, 1
        %s222 = scalar_lea.sflag [#allocation3], %s221
        %s223 = sand.u32 %s34, 1
        %s224 = smul.addr %s223, 256
        %s225 = scalar_lea.vmem [#allocation2], %s224
        // Predicated region
        $region33: #{vector_quantizer_forward.1} parent=31 // pred_check
          %p226 = pneg %p47
        $region34: #{vector_quantizer_forward.1} parent=31 // pred_check_branch
          %228 = sbr.rel (%p226) target = $region36
        $region35: #{vector_quantizer_forward.1} parent=31 // pred_region
          %230 = dma.done %s222, 4096
        $region36: #{vector_quantizer_forward.1} parent=31 // pred_fallthru
          _
        %s231 = sand.u32 %s34, 1
        %s232 = scalar_lea.sflag [#allocation3], %s231
        %s233 = sand.u32 %s34, 1
        %s234 = smul.addr %s233, 256
        %s235 = scalar_lea.vmem [#allocation2], %s234
        %p236 = pneg %p47
        %p237 = pneg %p44
        %p238 = pneg %p68
        %p239 = pneg %p65
        %p240 = pneg %p89
        %p241 = pneg %p86
        %p242 = pneg %p115
        %p243 = pneg %p112
        %s244 = sand.u32 %s102, 1
        %s245 = scalar_lea.sflag [#allocation4], %s244
        %s246 = sand.u32 %s102, 1
        %s247 = smul.addr %s246, 256
        %s248 = scalar_lea.vmem [#allocation5], %s247
        %p249 = pneg %p141
        %p250 = pneg %p138
        %s251 = sand.u32 %s128, 1
        %s252 = scalar_lea.sflag [#allocation7], %s251
        %s253 = sand.u32 %s128, 1
        %s254 = smul.addr %s253, 2
        %s255 = scalar_lea.vmem [#allocation6], %s254
        %p256 = pneg %p167
        %p257 = pneg %p164
        %s258 = smul.u32 2, %s26
        %p259 = scmp.lt.s32.totalorder %s258, 3
        %s260 = scalar_select %p259, %s258, 3
        %s261 = scalar_lea.vmem %s5, %s260
        %s262 = smul.u32 32, %s26
        %s263 = smul.u32 32, %s26
        %s264 = smul.u32 2, %s26
        %s265 = smul.u32 2, %s26
        %p266 = scmp.lt.s32.totalorder %s265, 3
        %s267 = scalar_select %p266, %s265, 3
        %s268 = scalar_lea.vmem %s5, %s267
        %s269 = smul.u32 2, %s26
        %v270 = vld [vmem:[%s225] sm:$0xff]
        %v271 = vld [vmem:[%s225 + $0x8] sm:$0xff]
        %v272 = vld [vmem:[%s225 + $0x10] sm:$0xff]
        %v273 = vld [vmem:[%s225 + $0x18] sm:$0xff]
        %v274 = vld [vmem:[%s225 + $0x20] sm:$0xff]
        %v275 = vld [vmem:[%s225 + $0x28] sm:$0xff]
        %v276 = vld [vmem:[%s225 + $0x30] sm:$0xff]
        %v277 = vld [vmem:[%s225 + $0x38] sm:$0xff]
        %v278 = vld [vmem:[%s225 + $0x40] sm:$0xff]
        %v279 = vld [vmem:[%s225 + $0x48] sm:$0xff]
        %v280 = vld [vmem:[%s225 + $0x50] sm:$0xff]
        %v281 = vld [vmem:[%s225 + $0x58] sm:$0xff]
        %v282 = vld [vmem:[%s225 + $0x60] sm:$0xff]
        %v283 = vld [vmem:[%s225 + $0x68] sm:$0xff]
        %v284 = vld [vmem:[%s225 + $0x70] sm:$0xff]
        %v285 = vld [vmem:[%s225 + $0x78] sm:$0xff]
        %v286 = vld [vmem:[%s225 + $0x80] sm:$0xff]
        %v287 = vld [vmem:[%s225 + $0x88] sm:$0xff]
        %v288 = vld [vmem:[%s225 + $0x90] sm:$0xff]
        %v289 = vld [vmem:[%s225 + $0x98] sm:$0xff]
        %v290 = vld [vmem:[%s225 + $0xa0] sm:$0xff]
        %v291 = vld [vmem:[%s225 + $0xa8] sm:$0xff]
        %v292 = vld [vmem:[%s225 + $0xb0] sm:$0xff]
        %v293 = vld [vmem:[%s225 + $0xb8] sm:$0xff]
        %v294 = vld [vmem:[%s225 + $0xc0] sm:$0xff]
        %v295 = vld [vmem:[%s225 + $0xc8] sm:$0xff]
        %v296 = vld [vmem:[%s225 + $0xd0] sm:$0xff]
        %v297 = vld [vmem:[%s225 + $0xd8] sm:$0xff]
        %v298 = vld [vmem:[%s225 + $0xe0] sm:$0xff]
        %v299 = vld [vmem:[%s225 + $0xe8] sm:$0xff]
        %v300 = vld [vmem:[%s225 + $0xf0] sm:$0xff]
        %v301 = vld [vmem:[%s225 + $0xf8] sm:$0xff]
        %v302 = vld [vmem:[%s1] sm:$0xff]
        %v303 = vld [vmem:[%s1 + $0x8] sm:$0xff]
        %v304 = vld [vmem:[%s1 + $0x10] sm:$0xff]
        %v305 = vld [vmem:[%s1 + $0x18] sm:$0xff]
        %v306 = vld [vmem:[%s1 + $0x20] sm:$0xff]
        %v307 = vld [vmem:[%s1 + $0x28] sm:$0xff]
        %v308 = vld [vmem:[%s1 + $0x30] sm:$0xff]
        %v309 = vld [vmem:[%s1 + $0x38] sm:$0xff]
        %v310 = vld [vmem:[%s2] sm:$0x1]
        %v311 = vmul.f32 %v270, %v270
        %v312 = vmul.f32 %v271, %v271
        %v313 = vmul.f32 %v272, %v272
        %v314 = vmul.f32 %v273, %v273
        %v315 = vmul.f32 %v274, %v274
        %v316 = vmul.f32 %v275, %v275
        %v317 = vmul.f32 %v276, %v276
        %v318 = vmul.f32 %v277, %v277
        %v319 = vmul.f32 %v278, %v278
        %v320 = vmul.f32 %v279, %v279
        %v321 = vmul.f32 %v280, %v280
        %v322 = vmul.f32 %v281, %v281
        %v323 = vmul.f32 %v282, %v282
        %v324 = vmul.f32 %v283, %v283
        %v325 = vmul.f32 %v284, %v284
        %v326 = vmul.f32 %v285, %v285
        %v327 = vmul.f32 %v286, %v286
        %v328 = vmul.f32 %v287, %v287
        %v329 = vmul.f32 %v288, %v288
        %v330 = vmul.f32 %v289, %v289
        %v331 = vmul.f32 %v290, %v290
        %v332 = vmul.f32 %v291, %v291
        %v333 = vmul.f32 %v292, %v292
        %v334 = vmul.f32 %v293, %v293
        %v335 = vmul.f32 %v294, %v294
        %v336 = vmul.f32 %v295, %v295
        %v337 = vmul.f32 %v296, %v296
        %v338 = vmul.f32 %v297, %v297
        %v339 = vmul.f32 %v298, %v298
        %v340 = vmul.f32 %v299, %v299
        %v341 = vmul.f32 %v300, %v300
        %v342 = vmul.f32 %v301, %v301
        %vm343 = vcmask 261120
        %v344 = vsel %vm343, %v311, 0.0
        %345 = vadd.xlane.f32.xlu0 %v344
        %v346 = vpop.xlane.xlu0 %345
        %v347 = vsel %vm343, %v312, 0.0
        %348 = vadd.xlane.f32.xlu0 %v347
        %v349 = vpop.xlane.xlu0 %348
        %v350 = vsel %vm343, %v313, 0.0
        %351 = vadd.xlane.f32.xlu0 %v350
        %v352 = vpop.xlane.xlu0 %351
        %v353 = vsel %vm343, %v314, 0.0
        %354 = vadd.xlane.f32.xlu0 %v353
        %v355 = vpop.xlane.xlu0 %354
        %v356 = vsel %vm343, %v315, 0.0
        %357 = vadd.xlane.f32.xlu0 %v356
        %v358 = vpop.xlane.xlu0 %357
        %v359 = vsel %vm343, %v316, 0.0
        %360 = vadd.xlane.f32.xlu0 %v359
        %v361 = vpop.xlane.xlu0 %360
        %v362 = vsel %vm343, %v317, 0.0
        %363 = vadd.xlane.f32.xlu0 %v362
        %v364 = vpop.xlane.xlu0 %363
        %v365 = vsel %vm343, %v318, 0.0
        %366 = vadd.xlane.f32.xlu0 %v365
        %v367 = vpop.xlane.xlu0 %366
        %v368 = vsel %vm343, %v319, 0.0
        %369 = vadd.xlane.f32.xlu0 %v368
        %v370 = vpop.xlane.xlu0 %369
        %v371 = vsel %vm343, %v320, 0.0
        %372 = vadd.xlane.f32.xlu0 %v371
        %v373 = vpop.xlane.xlu0 %372
        %v374 = vsel %vm343, %v321, 0.0
        %375 = vadd.xlane.f32.xlu0 %v374
        %v376 = vpop.xlane.xlu0 %375
        %v377 = vsel %vm343, %v322, 0.0
        %378 = vadd.xlane.f32.xlu0 %v377
        %v379 = vpop.xlane.xlu0 %378
        %v380 = vsel %vm343, %v323, 0.0
        %381 = vadd.xlane.f32.xlu0 %v380
        %v382 = vpop.xlane.xlu0 %381
        %v383 = vsel %vm343, %v324, 0.0
        %384 = vadd.xlane.f32.xlu0 %v383
        %v385 = vpop.xlane.xlu0 %384
        %v386 = vsel %vm343, %v325, 0.0
        %387 = vadd.xlane.f32.xlu0 %v386
        %v388 = vpop.xlane.xlu0 %387
        %v389 = vsel %vm343, %v326, 0.0
        %390 = vadd.xlane.f32.xlu0 %v389
        %v391 = vpop.xlane.xlu0 %390
        %v392 = vsel %vm343, %v327, 0.0
        %393 = vadd.xlane.f32.xlu0 %v392
        %v394 = vpop.xlane.xlu0 %393
        %v395 = vsel %vm343, %v328, 0.0
        %396 = vadd.xlane.f32.xlu0 %v395
        %v397 = vpop.xlane.xlu0 %396
        %v398 = vsel %vm343, %v329, 0.0
        %399 = vadd.xlane.f32.xlu0 %v398
        %v400 = vpop.xlane.xlu0 %399
        %v401 = vsel %vm343, %v330, 0.0
        %402 = vadd.xlane.f32.xlu0 %v401
        %v403 = vpop.xlane.xlu0 %402
        %v404 = vsel %vm343, %v331, 0.0
        %405 = vadd.xlane.f32.xlu0 %v404
        %v406 = vpop.xlane.xlu0 %405
        %v407 = vsel %vm343, %v332, 0.0
        %408 = vadd.xlane.f32.xlu0 %v407
        %v409 = vpop.xlane.xlu0 %408
        %v410 = vsel %vm343, %v333, 0.0
        %411 = vadd.xlane.f32.xlu0 %v410
        %v412 = vpop.xlane.xlu0 %411
        %v413 = vsel %vm343, %v334, 0.0
        %414 = vadd.xlane.f32.xlu0 %v413
        %v415 = vpop.xlane.xlu0 %414
        %v416 = vsel %vm343, %v335, 0.0
        %417 = vadd.xlane.f32.xlu0 %v416
        %v418 = vpop.xlane.xlu0 %417
        %v419 = vsel %vm343, %v336, 0.0
        %420 = vadd.xlane.f32.xlu0 %v419
        %v421 = vpop.xlane.xlu0 %420
        %v422 = vsel %vm343, %v337, 0.0
        %423 = vadd.xlane.f32.xlu0 %v422
        %v424 = vpop.xlane.xlu0 %423
        %v425 = vsel %vm343, %v338, 0.0
        %426 = vadd.xlane.f32.xlu0 %v425
        %v427 = vpop.xlane.xlu0 %426
        %v428 = vsel %vm343, %v339, 0.0
        %429 = vadd.xlane.f32.xlu0 %v428
        %v430 = vpop.xlane.xlu0 %429
        %v431 = vsel %vm343, %v340, 0.0
        %432 = vadd.xlane.f32.xlu0 %v431
        %v433 = vpop.xlane.xlu0 %432
        %v434 = vsel %vm343, %v341, 0.0
        %435 = vadd.xlane.f32.xlu0 %v434
        %v436 = vpop.xlane.xlu0 %435
        %v437 = vsel %vm343, %v342, 0.0
        %438 = vadd.xlane.f32.xlu0 %v437
        %v439 = vpop.xlane.xlu0 %438
        %v441 = vsel %vm343, %v270, 0
        %v444 = vsel %vm343, %v271, 0
        %v447 = vsel %vm343, %v272, 0
        %v450 = vsel %vm343, %v273, 0
        %v453 = vsel %vm343, %v274, 0
        %v456 = vsel %vm343, %v275, 0
        %v459 = vsel %vm343, %v276, 0
        %v462 = vsel %vm343, %v277, 0
        %v465 = vsel %vm343, %v278, 0
        %v468 = vsel %vm343, %v279, 0
        %v471 = vsel %vm343, %v280, 0
        %v474 = vsel %vm343, %v281, 0
        %v477 = vsel %vm343, %v282, 0
        %v480 = vsel %vm343, %v283, 0
        %v483 = vsel %vm343, %v284, 0
        %v486 = vsel %vm343, %v285, 0
        %v489 = vsel %vm343, %v286, 0
        %v492 = vsel %vm343, %v287, 0
        %v495 = vsel %vm343, %v288, 0
        %v498 = vsel %vm343, %v289, 0
        %v501 = vsel %vm343, %v290, 0
        %v504 = vsel %vm343, %v291, 0
        %v507 = vsel %vm343, %v292, 0
        %v510 = vsel %vm343, %v293, 0
        %v513 = vsel %vm343, %v294, 0
        %v516 = vsel %vm343, %v295, 0
        %v519 = vsel %vm343, %v296, 0
        %v522 = vsel %vm343, %v297, 0
        %v525 = vsel %vm343, %v298, 0
        %v528 = vsel %vm343, %v299, 0
        %v531 = vsel %vm343, %v300, 0
        %v534 = vsel %vm343, %v301, 0
        %v537 = vsel %vm343, %v302, 0
        %v540 = vsel %vm343, %v303, 0
        %v543 = vsel %vm343, %v304, 0
        %v546 = vsel %vm343, %v305, 0
        %v549 = vsel %vm343, %v306, 0
        %v552 = vsel %vm343, %v307, 0
        %v555 = vsel %vm343, %v308, 0
        %v558 = vsel %vm343, %v309, 0
        %560 = vmatpush.xpose.msra.mxu0 0.0
        %561 = vmatpush.xpose.msra.mxu0 0.0
        %562 = vmatpush.xpose.msra.mxu0 0.0
        %563 = vmatpush.xpose.msra.mxu0 0.0
        %564 = vmatpush.xpose.msra.mxu0 0.0
        %565 = vmatpush.xpose.msra.mxu0 0.0
        %566 = vmatpush.xpose.msra.mxu0 0.0
        %567 = vmatpush.xpose.msra.mxu0 0.0
        %568 = vmatpush.xpose.msra.mxu0 %v558
        %569 = vmatpush.xpose.msra.mxu0 %v555
        %570 = vmatpush.xpose.msra.mxu0 %v552
        %571 = vmatpush.xpose.msra.mxu0 %v549
        %572 = vmatpush.xpose.msra.mxu0 %v546
        %573 = vmatpush.xpose.msra.mxu0 %v543
        %574 = vmatpush.xpose.msra.mxu0 %v540
        %575 = vmatpush.xpose.msra.mxu0 %v537
        %576 = vmatmul.f32.gmra.mxu0 %v441
        %v577 = vpop.f32.mrf.mxu0
        %v578 = vadd.f32 0.0, %v577
        %579 = vmatmul.f32.gmra.mxu0 %v444
        %v580 = vpop.f32.mrf.mxu0
        %v581 = vadd.f32 0.0, %v580
        %582 = vmatmul.f32.gmra.mxu0 %v447
        %v583 = vpop.f32.mrf.mxu0
        %v584 = vadd.f32 0.0, %v583
        %585 = vmatmul.f32.gmra.mxu0 %v450
        %v586 = vpop.f32.mrf.mxu0
        %v587 = vadd.f32 0.0, %v586
        %588 = vmatmul.f32.gmra.mxu0 %v453
        %v589 = vpop.f32.mrf.mxu0
        %v590 = vadd.f32 0.0, %v589
        %591 = vmatmul.f32.gmra.mxu0 %v456
        %v592 = vpop.f32.mrf.mxu0
        %v593 = vadd.f32 0.0, %v592
        %594 = vmatmul.f32.gmra.mxu0 %v459
        %v595 = vpop.f32.mrf.mxu0
        %v596 = vadd.f32 0.0, %v595
        %597 = vmatmul.f32.gmra.mxu0 %v462
        %v598 = vpop.f32.mrf.mxu0
        %v599 = vadd.f32 0.0, %v598
        %600 = vmatmul.f32.gmra.mxu0 %v465
        %v601 = vpop.f32.mrf.mxu0
        %v602 = vadd.f32 0.0, %v601
        %603 = vmatmul.f32.gmra.mxu0 %v468
        %v604 = vpop.f32.mrf.mxu0
        %v605 = vadd.f32 0.0, %v604
        %606 = vmatmul.f32.gmra.mxu0 %v471
        %v607 = vpop.f32.mrf.mxu0
        %v608 = vadd.f32 0.0, %v607
        %609 = vmatmul.f32.gmra.mxu0 %v474
        %v610 = vpop.f32.mrf.mxu0
        %v611 = vadd.f32 0.0, %v610
        %612 = vmatmul.f32.gmra.mxu0 %v477
        %v613 = vpop.f32.mrf.mxu0
        %v614 = vadd.f32 0.0, %v613
        %615 = vmatmul.f32.gmra.mxu0 %v480
        %v616 = vpop.f32.mrf.mxu0
        %v617 = vadd.f32 0.0, %v616
        %618 = vmatmul.f32.gmra.mxu0 %v483
        %v619 = vpop.f32.mrf.mxu0
        %v620 = vadd.f32 0.0, %v619
        %621 = vmatmul.f32.gmra.mxu0 %v486
        %v622 = vpop.f32.mrf.mxu0
        %v623 = vadd.f32 0.0, %v622
        %624 = vmatmul.f32.gmra.mxu0 %v489
        %v625 = vpop.f32.mrf.mxu0
        %v626 = vadd.f32 0.0, %v625
        %627 = vmatmul.f32.gmra.mxu0 %v492
        %v628 = vpop.f32.mrf.mxu0
        %v629 = vadd.f32 0.0, %v628
        %630 = vmatmul.f32.gmra.mxu0 %v495
        %v631 = vpop.f32.mrf.mxu0
        %v632 = vadd.f32 0.0, %v631
        %633 = vmatmul.f32.gmra.mxu0 %v498
        %v634 = vpop.f32.mrf.mxu0
        %v635 = vadd.f32 0.0, %v634
        %636 = vmatmul.f32.gmra.mxu0 %v501
        %v637 = vpop.f32.mrf.mxu0
        %v638 = vadd.f32 0.0, %v637
        %639 = vmatmul.f32.gmra.mxu0 %v504
        %v640 = vpop.f32.mrf.mxu0
        %v641 = vadd.f32 0.0, %v640
        %642 = vmatmul.f32.gmra.mxu0 %v507
        %v643 = vpop.f32.mrf.mxu0
        %v644 = vadd.f32 0.0, %v643
        %645 = vmatmul.f32.gmra.mxu0 %v510
        %v646 = vpop.f32.mrf.mxu0
        %v647 = vadd.f32 0.0, %v646
        %648 = vmatmul.f32.gmra.mxu0 %v513
        %v649 = vpop.f32.mrf.mxu0
        %v650 = vadd.f32 0.0, %v649
        %651 = vmatmul.f32.gmra.mxu0 %v516
        %v652 = vpop.f32.mrf.mxu0
        %v653 = vadd.f32 0.0, %v652
        %654 = vmatmul.f32.gmra.mxu0 %v519
        %v655 = vpop.f32.mrf.mxu0
        %v656 = vadd.f32 0.0, %v655
        %657 = vmatmul.f32.gmra.mxu0 %v522
        %v658 = vpop.f32.mrf.mxu0
        %v659 = vadd.f32 0.0, %v658
        %660 = vmatmul.f32.gmra.mxu0 %v525
        %v661 = vpop.f32.mrf.mxu0
        %v662 = vadd.f32 0.0, %v661
        %663 = vmatmul.f32.gmra.mxu0 %v528
        %v664 = vpop.f32.mrf.mxu0
        %v665 = vadd.f32 0.0, %v664
        %666 = vmatmul.f32.gmra.mxu0 %v531
        %v667 = vpop.f32.mrf.mxu0
        %v668 = vadd.f32 0.0, %v667
        %669 = vmatmul.f32.gmra.mxu0 %v534
        %v670 = vpop.f32.mrf.mxu0
        %v671 = vadd.f32 0.0, %v670
        %672 = vdwg.mxu0
        %v674 = vperm.slane %v310, 0
        %v676 = vadd.f32 %v346, %v674
        %v677 = vadd.f32 %v349, %v674
        %v678 = vadd.f32 %v352, %v674
        %v679 = vadd.f32 %v355, %v674
        %v680 = vadd.f32 %v358, %v674
        %v681 = vadd.f32 %v361, %v674
        %v682 = vadd.f32 %v364, %v674
        %v683 = vadd.f32 %v367, %v674
        %v684 = vadd.f32 %v370, %v674
        %v685 = vadd.f32 %v373, %v674
        %v686 = vadd.f32 %v376, %v674
        %v687 = vadd.f32 %v379, %v674
        %v688 = vadd.f32 %v382, %v674
        %v689 = vadd.f32 %v385, %v674
        %v690 = vadd.f32 %v388, %v674
        %v691 = vadd.f32 %v391, %v674
        %v692 = vadd.f32 %v394, %v674
        %v693 = vadd.f32 %v397, %v674
        %v694 = vadd.f32 %v400, %v674
        %v695 = vadd.f32 %v403, %v674
        %v696 = vadd.f32 %v406, %v674
        %v697 = vadd.f32 %v409, %v674
        %v698 = vadd.f32 %v412, %v674
        %v699 = vadd.f32 %v415, %v674
        %v700 = vadd.f32 %v418, %v674
        %v701 = vadd.f32 %v421, %v674
        %v702 = vadd.f32 %v424, %v674
        %v703 = vadd.f32 %v427, %v674
        %v704 = vadd.f32 %v430, %v674
        %v705 = vadd.f32 %v433, %v674
        %v706 = vadd.f32 %v436, %v674
        %v707 = vadd.f32 %v439, %v674
        %v708 = vmul.f32 %v578, 2.0
        %v709 = vmul.f32 %v581, 2.0
        %v710 = vmul.f32 %v584, 2.0
        %v711 = vmul.f32 %v587, 2.0
        %v712 = vmul.f32 %v590, 2.0
        %v713 = vmul.f32 %v593, 2.0
        %v714 = vmul.f32 %v596, 2.0
        %v715 = vmul.f32 %v599, 2.0
        %v716 = vmul.f32 %v602, 2.0
        %v717 = vmul.f32 %v605, 2.0
        %v718 = vmul.f32 %v608, 2.0
        %v719 = vmul.f32 %v611, 2.0
        %v720 = vmul.f32 %v614, 2.0
        %v721 = vmul.f32 %v617, 2.0
        %v722 = vmul.f32 %v620, 2.0
        %v723 = vmul.f32 %v623, 2.0
        %v724 = vmul.f32 %v626, 2.0
        %v725 = vmul.f32 %v629, 2.0
        %v726 = vmul.f32 %v632, 2.0
        %v727 = vmul.f32 %v635, 2.0
        %v728 = vmul.f32 %v638, 2.0
        %v729 = vmul.f32 %v641, 2.0
        %v730 = vmul.f32 %v644, 2.0
        %v731 = vmul.f32 %v647, 2.0
        %v732 = vmul.f32 %v650, 2.0
        %v733 = vmul.f32 %v653, 2.0
        %v734 = vmul.f32 %v656, 2.0
        %v735 = vmul.f32 %v659, 2.0
        %v736 = vmul.f32 %v662, 2.0
        %v737 = vmul.f32 %v665, 2.0
        %v738 = vmul.f32 %v668, 2.0
        %v739 = vmul.f32 %v671, 2.0
        %v740 = vsub.f32 %v676, %v708
        %v741 = vsub.f32 %v677, %v709
        %v742 = vsub.f32 %v678, %v710
        %v743 = vsub.f32 %v679, %v711
        %v744 = vsub.f32 %v680, %v712
        %v745 = vsub.f32 %v681, %v713
        %v746 = vsub.f32 %v682, %v714
        %v747 = vsub.f32 %v683, %v715
        %v748 = vsub.f32 %v684, %v716
        %v749 = vsub.f32 %v685, %v717
        %v750 = vsub.f32 %v686, %v718
        %v751 = vsub.f32 %v687, %v719
        %v752 = vsub.f32 %v688, %v720
        %v753 = vsub.f32 %v689, %v721
        %v754 = vsub.f32 %v690, %v722
        %v755 = vsub.f32 %v691, %v723
        %v756 = vsub.f32 %v692, %v724
        %v757 = vsub.f32 %v693, %v725
        %v758 = vsub.f32 %v694, %v726
        %v759 = vsub.f32 %v695, %v727
        %v760 = vsub.f32 %v696, %v728
        %v761 = vsub.f32 %v697, %v729
        %v762 = vsub.f32 %v698, %v730
        %v763 = vsub.f32 %v699, %v731
        %v764 = vsub.f32 %v700, %v732
        %v765 = vsub.f32 %v701, %v733
        %v766 = vsub.f32 %v702, %v734
        %v767 = vsub.f32 %v703, %v735
        %v768 = vsub.f32 %v704, %v736
        %v769 = vsub.f32 %v705, %v737
        %v770 = vsub.f32 %v706, %v738
        %v771 = vsub.f32 %v707, %v739
        %vm772 = vcmask 523264
        %v773 = vsel %vm772, %v740, inf
        %774 = vmin.index.xlane.f32.xlu0 %v773
        %v775 = vpop.xlane.xlu0 %774
        %v776 = vsel %vm772, %v741, inf
        %777 = vmin.index.xlane.f32.xlu0 %v776
        %v778 = vpop.xlane.xlu0 %777
        %v779 = vsel %vm772, %v742, inf
        %780 = vmin.index.xlane.f32.xlu0 %v779
        %v781 = vpop.xlane.xlu0 %780
        %v782 = vsel %vm772, %v743, inf
        %783 = vmin.index.xlane.f32.xlu0 %v782
        %v784 = vpop.xlane.xlu0 %783
        %v785 = vsel %vm772, %v744, inf
        %786 = vmin.index.xlane.f32.xlu0 %v785
        %v787 = vpop.xlane.xlu0 %786
        %v788 = vsel %vm772, %v745, inf
        %789 = vmin.index.xlane.f32.xlu0 %v788
        %v790 = vpop.xlane.xlu0 %789
        %v791 = vsel %vm772, %v746, inf
        %792 = vmin.index.xlane.f32.xlu0 %v791
        %v793 = vpop.xlane.xlu0 %792
        %v794 = vsel %vm772, %v747, inf
        %795 = vmin.index.xlane.f32.xlu0 %v794
        %v796 = vpop.xlane.xlu0 %795
        %v797 = vsel %vm772, %v748, inf
        %798 = vmin.index.xlane.f32.xlu0 %v797
        %v799 = vpop.xlane.xlu0 %798
        %v800 = vsel %vm772, %v749, inf
        %801 = vmin.index.xlane.f32.xlu0 %v800
        %v802 = vpop.xlane.xlu0 %801
        %v803 = vsel %vm772, %v750, inf
        %804 = vmin.index.xlane.f32.xlu0 %v803
        %v805 = vpop.xlane.xlu0 %804
        %v806 = vsel %vm772, %v751, inf
        %807 = vmin.index.xlane.f32.xlu0 %v806
        %v808 = vpop.xlane.xlu0 %807
        %v809 = vsel %vm772, %v752, inf
        %810 = vmin.index.xlane.f32.xlu0 %v809
        %v811 = vpop.xlane.xlu0 %810
        %v812 = vsel %vm772, %v753, inf
        %813 = vmin.index.xlane.f32.xlu0 %v812
        %v814 = vpop.xlane.xlu0 %813
        %v815 = vsel %vm772, %v754, inf
        %816 = vmin.index.xlane.f32.xlu0 %v815
        %v817 = vpop.xlane.xlu0 %816
        %v818 = vsel %vm772, %v755, inf
        %819 = vmin.index.xlane.f32.xlu0 %v818
        %v820 = vpop.xlane.xlu0 %819
        %v821 = vsel %vm772, %v756, inf
        %822 = vmin.index.xlane.f32.xlu0 %v821
        %v823 = vpop.xlane.xlu0 %822
        %v824 = vsel %vm772, %v757, inf
        %825 = vmin.index.xlane.f32.xlu0 %v824
        %v826 = vpop.xlane.xlu0 %825
        %v827 = vsel %vm772, %v758, inf
        %828 = vmin.index.xlane.f32.xlu0 %v827
        %v829 = vpop.xlane.xlu0 %828
        %v830 = vsel %vm772, %v759, inf
        %831 = vmin.index.xlane.f32.xlu0 %v830
        %v832 = vpop.xlane.xlu0 %831
        %v833 = vsel %vm772, %v760, inf
        %834 = vmin.index.xlane.f32.xlu0 %v833
        %v835 = vpop.xlane.xlu0 %834
        %v836 = vsel %vm772, %v761, inf
        %837 = vmin.index.xlane.f32.xlu0 %v836
        %v838 = vpop.xlane.xlu0 %837
        %v839 = vsel %vm772, %v762, inf
        %840 = vmin.index.xlane.f32.xlu0 %v839
        %v841 = vpop.xlane.xlu0 %840
        %v842 = vsel %vm772, %v763, inf
        %843 = vmin.index.xlane.f32.xlu0 %v842
        %v844 = vpop.xlane.xlu0 %843
        %v845 = vsel %vm772, %v764, inf
        %846 = vmin.index.xlane.f32.xlu0 %v845
        %v847 = vpop.xlane.xlu0 %846
        %v848 = vsel %vm772, %v765, inf
        %849 = vmin.index.xlane.f32.xlu0 %v848
        %v850 = vpop.xlane.xlu0 %849
        %v851 = vsel %vm772, %v766, inf
        %852 = vmin.index.xlane.f32.xlu0 %v851
        %v853 = vpop.xlane.xlu0 %852
        %v854 = vsel %vm772, %v767, inf
        %855 = vmin.index.xlane.f32.xlu0 %v854
        %v856 = vpop.xlane.xlu0 %855
        %v857 = vsel %vm772, %v768, inf
        %858 = vmin.index.xlane.f32.xlu0 %v857
        %v859 = vpop.xlane.xlu0 %858
        %v860 = vsel %vm772, %v769, inf
        %861 = vmin.index.xlane.f32.xlu0 %v860
        %v862 = vpop.xlane.xlu0 %861
        %v863 = vsel %vm772, %v770, inf
        %864 = vmin.index.xlane.f32.xlu0 %v863
        %v865 = vpop.xlane.xlu0 %864
        %v866 = vsel %vm772, %v771, inf
        %867 = vmin.index.xlane.f32.xlu0 %v866
        %v868 = vpop.xlane.xlu0 %867
        %v869 = vperm.slane %v775, 0
        %v870 = vperm.slane %v775, 1
        %v871 = vperm.slane %v775, 2
        %v872 = vperm.slane %v775, 3
        %v873 = vperm.slane %v775, 4
        %v874 = vperm.slane %v775, 5
        %v875 = vperm.slane %v775, 6
        %v876 = vperm.slane %v775, 7
        %v877 = vperm.slane %v778, 0
        %v878 = vperm.slane %v778, 1
        %v879 = vperm.slane %v778, 2
        %v880 = vperm.slane %v778, 3
        %v881 = vperm.slane %v778, 4
        %v882 = vperm.slane %v778, 5
        %v883 = vperm.slane %v778, 6
        %v884 = vperm.slane %v778, 7
        %v885 = vperm.slane %v781, 0
        %v886 = vperm.slane %v781, 1
        %v887 = vperm.slane %v781, 2
        %v888 = vperm.slane %v781, 3
        %v889 = vperm.slane %v781, 4
        %v890 = vperm.slane %v781, 5
        %v891 = vperm.slane %v781, 6
        %v892 = vperm.slane %v781, 7
        %v893 = vperm.slane %v784, 0
        %v894 = vperm.slane %v784, 1
        %v895 = vperm.slane %v784, 2
        %v896 = vperm.slane %v784, 3
        %v897 = vperm.slane %v784, 4
        %v898 = vperm.slane %v784, 5
        %v899 = vperm.slane %v784, 6
        %v900 = vperm.slane %v784, 7
        %v901 = vperm.slane %v787, 0
        %v902 = vperm.slane %v787, 1
        %v903 = vperm.slane %v787, 2
        %v904 = vperm.slane %v787, 3
        %v905 = vperm.slane %v787, 4
        %v906 = vperm.slane %v787, 5
        %v907 = vperm.slane %v787, 6
        %v908 = vperm.slane %v787, 7
        %v909 = vperm.slane %v790, 0
        %v910 = vperm.slane %v790, 1
        %v911 = vperm.slane %v790, 2
        %v912 = vperm.slane %v790, 3
        %v913 = vperm.slane %v790, 4
        %v914 = vperm.slane %v790, 5
        %v915 = vperm.slane %v790, 6
        %v916 = vperm.slane %v790, 7
        %v917 = vperm.slane %v793, 0
        %v918 = vperm.slane %v793, 1
        %v919 = vperm.slane %v793, 2
        %v920 = vperm.slane %v793, 3
        %v921 = vperm.slane %v793, 4
        %v922 = vperm.slane %v793, 5
        %v923 = vperm.slane %v793, 6
        %v924 = vperm.slane %v793, 7
        %v925 = vperm.slane %v796, 0
        %v926 = vperm.slane %v796, 1
        %v927 = vperm.slane %v796, 2
        %v928 = vperm.slane %v796, 3
        %v929 = vperm.slane %v796, 4
        %v930 = vperm.slane %v796, 5
        %v931 = vperm.slane %v796, 6
        %v932 = vperm.slane %v796, 7
        %v933 = vperm.slane %v799, 0
        %v934 = vperm.slane %v799, 1
        %v935 = vperm.slane %v799, 2
        %v936 = vperm.slane %v799, 3
        %v937 = vperm.slane %v799, 4
        %v938 = vperm.slane %v799, 5
        %v939 = vperm.slane %v799, 6
        %v940 = vperm.slane %v799, 7
        %v941 = vperm.slane %v802, 0
        %v942 = vperm.slane %v802, 1
        %v943 = vperm.slane %v802, 2
        %v944 = vperm.slane %v802, 3
        %v945 = vperm.slane %v802, 4
        %v946 = vperm.slane %v802, 5
        %v947 = vperm.slane %v802, 6
        %v948 = vperm.slane %v802, 7
        %v949 = vperm.slane %v805, 0
        %v950 = vperm.slane %v805, 1
        %v951 = vperm.slane %v805, 2
        %v952 = vperm.slane %v805, 3
        %v953 = vperm.slane %v805, 4
        %v954 = vperm.slane %v805, 5
        %v955 = vperm.slane %v805, 6
        %v956 = vperm.slane %v805, 7
        %v957 = vperm.slane %v808, 0
        %v958 = vperm.slane %v808, 1
        %v959 = vperm.slane %v808, 2
        %v960 = vperm.slane %v808, 3
        %v961 = vperm.slane %v808, 4
        %v962 = vperm.slane %v808, 5
        %v963 = vperm.slane %v808, 6
        %v964 = vperm.slane %v808, 7
        %v965 = vperm.slane %v811, 0
        %v966 = vperm.slane %v811, 1
        %v967 = vperm.slane %v811, 2
        %v968 = vperm.slane %v811, 3
        %v969 = vperm.slane %v811, 4
        %v970 = vperm.slane %v811, 5
        %v971 = vperm.slane %v811, 6
        %v972 = vperm.slane %v811, 7
        %v973 = vperm.slane %v814, 0
        %v974 = vperm.slane %v814, 1
        %v975 = vperm.slane %v814, 2
        %v976 = vperm.slane %v814, 3
        %v977 = vperm.slane %v814, 4
        %v978 = vperm.slane %v814, 5
        %v979 = vperm.slane %v814, 6
        %v980 = vperm.slane %v814, 7
        %v981 = vperm.slane %v817, 0
        %v982 = vperm.slane %v817, 1
        %v983 = vperm.slane %v817, 2
        %v984 = vperm.slane %v817, 3
        %v985 = vperm.slane %v817, 4
        %v986 = vperm.slane %v817, 5
        %v987 = vperm.slane %v817, 6
        %v988 = vperm.slane %v817, 7
        %v989 = vperm.slane %v820, 0
        %v990 = vperm.slane %v820, 1
        %v991 = vperm.slane %v820, 2
        %v992 = vperm.slane %v820, 3
        %v993 = vperm.slane %v820, 4
        %v994 = vperm.slane %v820, 5
        %v995 = vperm.slane %v820, 6
        %v996 = vperm.slane %v820, 7
        %v997 = vperm.slane %v823, 0
        %v998 = vperm.slane %v823, 1
        %v999 = vperm.slane %v823, 2
        %v1000 = vperm.slane %v823, 3
        %v1001 = vperm.slane %v823, 4
        %v1002 = vperm.slane %v823, 5
        %v1003 = vperm.slane %v823, 6
        %v1004 = vperm.slane %v823, 7
        %v1005 = vperm.slane %v826, 0
        %v1006 = vperm.slane %v826, 1
        %v1007 = vperm.slane %v826, 2
        %v1008 = vperm.slane %v826, 3
        %v1009 = vperm.slane %v826, 4
        %v1010 = vperm.slane %v826, 5
        %v1011 = vperm.slane %v826, 6
        %v1012 = vperm.slane %v826, 7
        %v1013 = vperm.slane %v829, 0
        %v1014 = vperm.slane %v829, 1
        %v1015 = vperm.slane %v829, 2
        %v1016 = vperm.slane %v829, 3
        %v1017 = vperm.slane %v829, 4
        %v1018 = vperm.slane %v829, 5
        %v1019 = vperm.slane %v829, 6
        %v1020 = vperm.slane %v829, 7
        %v1021 = vperm.slane %v832, 0
        %v1022 = vperm.slane %v832, 1
        %v1023 = vperm.slane %v832, 2
        %v1024 = vperm.slane %v832, 3
        %v1025 = vperm.slane %v832, 4
        %v1026 = vperm.slane %v832, 5
        %v1027 = vperm.slane %v832, 6
        %v1028 = vperm.slane %v832, 7
        %v1029 = vperm.slane %v835, 0
        %v1030 = vperm.slane %v835, 1
        %v1031 = vperm.slane %v835, 2
        %v1032 = vperm.slane %v835, 3
        %v1033 = vperm.slane %v835, 4
        %v1034 = vperm.slane %v835, 5
        %v1035 = vperm.slane %v835, 6
        %v1036 = vperm.slane %v835, 7
        %v1037 = vperm.slane %v838, 0
        %v1038 = vperm.slane %v838, 1
        %v1039 = vperm.slane %v838, 2
        %v1040 = vperm.slane %v838, 3
        %v1041 = vperm.slane %v838, 4
        %v1042 = vperm.slane %v838, 5
        %v1043 = vperm.slane %v838, 6
        %v1044 = vperm.slane %v838, 7
        %v1045 = vperm.slane %v841, 0
        %v1046 = vperm.slane %v841, 1
        %v1047 = vperm.slane %v841, 2
        %v1048 = vperm.slane %v841, 3
        %v1049 = vperm.slane %v841, 4
        %v1050 = vperm.slane %v841, 5
        %v1051 = vperm.slane %v841, 6
        %v1052 = vperm.slane %v841, 7
        %v1053 = vperm.slane %v844, 0
        %v1054 = vperm.slane %v844, 1
        %v1055 = vperm.slane %v844, 2
        %v1056 = vperm.slane %v844, 3
        %v1057 = vperm.slane %v844, 4
        %v1058 = vperm.slane %v844, 5
        %v1059 = vperm.slane %v844, 6
        %v1060 = vperm.slane %v844, 7
        %v1061 = vperm.slane %v847, 0
        %v1062 = vperm.slane %v847, 1
        %v1063 = vperm.slane %v847, 2
        %v1064 = vperm.slane %v847, 3
        %v1065 = vperm.slane %v847, 4
        %v1066 = vperm.slane %v847, 5
        %v1067 = vperm.slane %v847, 6
        %v1068 = vperm.slane %v847, 7
        %v1069 = vperm.slane %v850, 0
        %v1070 = vperm.slane %v850, 1
        %v1071 = vperm.slane %v850, 2
        %v1072 = vperm.slane %v850, 3
        %v1073 = vperm.slane %v850, 4
        %v1074 = vperm.slane %v850, 5
        %v1075 = vperm.slane %v850, 6
        %v1076 = vperm.slane %v850, 7
        %v1077 = vperm.slane %v853, 0
        %v1078 = vperm.slane %v853, 1
        %v1079 = vperm.slane %v853, 2
        %v1080 = vperm.slane %v853, 3
        %v1081 = vperm.slane %v853, 4
        %v1082 = vperm.slane %v853, 5
        %v1083 = vperm.slane %v853, 6
        %v1084 = vperm.slane %v853, 7
        %v1085 = vperm.slane %v856, 0
        %v1086 = vperm.slane %v856, 1
        %v1087 = vperm.slane %v856, 2
        %v1088 = vperm.slane %v856, 3
        %v1089 = vperm.slane %v856, 4
        %v1090 = vperm.slane %v856, 5
        %v1091 = vperm.slane %v856, 6
        %v1092 = vperm.slane %v856, 7
        %v1093 = vperm.slane %v859, 0
        %v1094 = vperm.slane %v859, 1
        %v1095 = vperm.slane %v859, 2
        %v1096 = vperm.slane %v859, 3
        %v1097 = vperm.slane %v859, 4
        %v1098 = vperm.slane %v859, 5
        %v1099 = vperm.slane %v859, 6
        %v1100 = vperm.slane %v859, 7
        %v1101 = vperm.slane %v862, 0
        %v1102 = vperm.slane %v862, 1
        %v1103 = vperm.slane %v862, 2
        %v1104 = vperm.slane %v862, 3
        %v1105 = vperm.slane %v862, 4
        %v1106 = vperm.slane %v862, 5
        %v1107 = vperm.slane %v862, 6
        %v1108 = vperm.slane %v862, 7
        %v1109 = vperm.slane %v865, 0
        %v1110 = vperm.slane %v865, 1
        %v1111 = vperm.slane %v865, 2
        %v1112 = vperm.slane %v865, 3
        %v1113 = vperm.slane %v865, 4
        %v1114 = vperm.slane %v865, 5
        %v1115 = vperm.slane %v865, 6
        %v1116 = vperm.slane %v865, 7
        %v1117 = vperm.slane %v868, 0
        %v1118 = vperm.slane %v868, 1
        %v1119 = vperm.slane %v868, 2
        %v1120 = vperm.slane %v868, 3
        %v1121 = vperm.slane %v868, 4
        %v1122 = vperm.slane %v868, 5
        %v1123 = vperm.slane %v868, 6
        %v1124 = vperm.slane %v868, 7
        %1125 = vst [vmem:[#allocation1] ss:$9 sm:$0xff] %v869
        %s1126 = scalar_lea.vmem [#allocation1], 1
        %1127 = vst [vmem:[%s1126] ss:$9 sm:$0xff] %v870
        %s1128 = scalar_lea.vmem [#allocation1], 2
        %1129 = vst [vmem:[%s1128] ss:$9 sm:$0xff] %v871
        %s1130 = scalar_lea.vmem [#allocation1], 3
        %1131 = vst [vmem:[%s1130] ss:$9 sm:$0xff] %v872
        %s1132 = scalar_lea.vmem [#allocation1], 4
        %1133 = vst [vmem:[%s1132] ss:$9 sm:$0xff] %v873
        %s1134 = scalar_lea.vmem [#allocation1], 5
        %1135 = vst [vmem:[%s1134] ss:$9 sm:$0xff] %v874
        %s1136 = scalar_lea.vmem [#allocation1], 6
        %1137 = vst [vmem:[%s1136] ss:$9 sm:$0xff] %v875
        %s1138 = scalar_lea.vmem [#allocation1], 7
        %1139 = vst [vmem:[%s1138] ss:$9 sm:$0xff] %v876
        %v1140 = vld [vmem:[#allocation1] sm:$0xff]
        %1141 = vst [vmem:[#allocation1] ss:$9 sm:$0xff] %v877
        %1142 = vst [vmem:[%s1126] ss:$9 sm:$0xff] %v878
        %1143 = vst [vmem:[%s1128] ss:$9 sm:$0xff] %v879
        %1144 = vst [vmem:[%s1130] ss:$9 sm:$0xff] %v880
        %1145 = vst [vmem:[%s1132] ss:$9 sm:$0xff] %v881
        %1146 = vst [vmem:[%s1134] ss:$9 sm:$0xff] %v882
        %1147 = vst [vmem:[%s1136] ss:$9 sm:$0xff] %v883
        %1148 = vst [vmem:[%s1138] ss:$9 sm:$0xff] %v884
        %v1149 = vld [vmem:[#allocation1] sm:$0xff]
        %1150 = vst [vmem:[#allocation1] ss:$9 sm:$0xff] %v885
        %1151 = vst [vmem:[%s1126] ss:$9 sm:$0xff] %v886
        %1152 = vst [vmem:[%s1128] ss:$9 sm:$0xff] %v887
        %1153 = vst [vmem:[%s1130] ss:$9 sm:$0xff] %v888
        %1154 = vst [vmem:[%s1132] ss:$9 sm:$0xff] %v889
        %1155 = vst [vmem:[%s1134] ss:$9 sm:$0xff] %v890
        %1156 = vst [vmem:[%s1136] ss:$9 sm:$0xff] %v891
        %1157 = vst [vmem:[%s1138] ss:$9 sm:$0xff] %v892
        %v1158 = vld [vmem:[#allocation1] sm:$0xff]
        %1159 = vst [vmem:[#allocation1] ss:$9 sm:$0xff] %v893
        %1160 = vst [vmem:[%s1126] ss:$9 sm:$0xff] %v894
        %1161 = vst [vmem:[%s1128] ss:$9 sm:$0xff] %v895
        %1162 = vst [vmem:[%s1130] ss:$9 sm:$0xff] %v896
        %1163 = vst [vmem:[%s1132] ss:$9 sm:$0xff] %v897
        %1164 = vst [vmem:[%s1134] ss:$9 sm:$0xff] %v898
        %1165 = vst [vmem:[%s1136] ss:$9 sm:$0xff] %v899
        %1166 = vst [vmem:[%s1138] ss:$9 sm:$0xff] %v900
        %v1167 = vld [vmem:[#allocation1] sm:$0xff]
        %1168 = vst [vmem:[#allocation1] ss:$9 sm:$0xff] %v901
        %1169 = vst [vmem:[%s1126] ss:$9 sm:$0xff] %v902
        %1170 = vst [vmem:[%s1128] ss:$9 sm:$0xff] %v903
        %1171 = vst [vmem:[%s1130] ss:$9 sm:$0xff] %v904
        %1172 = vst [vmem:[%s1132] ss:$9 sm:$0xff] %v905
        %1173 = vst [vmem:[%s1134] ss:$9 sm:$0xff] %v906
        %1174 = vst [vmem:[%s1136] ss:$9 sm:$0xff] %v907
        %1175 = vst [vmem:[%s1138] ss:$9 sm:$0xff] %v908
        %v1176 = vld [vmem:[#allocation1] sm:$0xff]
        %1177 = vst [vmem:[#allocation1] ss:$9 sm:$0xff] %v909
        %1178 = vst [vmem:[%s1126] ss:$9 sm:$0xff] %v910
        %1179 = vst [vmem:[%s1128] ss:$9 sm:$0xff] %v911
        %1180 = vst [vmem:[%s1130] ss:$9 sm:$0xff] %v912
        %1181 = vst [vmem:[%s1132] ss:$9 sm:$0xff] %v913
        %1182 = vst [vmem:[%s1134] ss:$9 sm:$0xff] %v914
        %1183 = vst [vmem:[%s1136] ss:$9 sm:$0xff] %v915
        %1184 = vst [vmem:[%s1138] ss:$9 sm:$0xff] %v916
        %v1185 = vld [vmem:[#allocation1] sm:$0xff]
        %1186 = vst [vmem:[#allocation1] ss:$9 sm:$0xff] %v917
        %1187 = vst [vmem:[%s1126] ss:$9 sm:$0xff] %v918
        %1188 = vst [vmem:[%s1128] ss:$9 sm:$0xff] %v919
        %1189 = vst [vmem:[%s1130] ss:$9 sm:$0xff] %v920
        %1190 = vst [vmem:[%s1132] ss:$9 sm:$0xff] %v921
        %1191 = vst [vmem:[%s1134] ss:$9 sm:$0xff] %v922
        %1192 = vst [vmem:[%s1136] ss:$9 sm:$0xff] %v923
        %1193 = vst [vmem:[%s1138] ss:$9 sm:$0xff] %v924
        %v1194 = vld [vmem:[#allocation1] sm:$0xff]
        %1195 = vst [vmem:[#allocation1] ss:$9 sm:$0xff] %v925
        %1196 = vst [vmem:[%s1126] ss:$9 sm:$0xff] %v926
        %1197 = vst [vmem:[%s1128] ss:$9 sm:$0xff] %v927
        %1198 = vst [vmem:[%s1130] ss:$9 sm:$0xff] %v928
        %1199 = vst [vmem:[%s1132] ss:$9 sm:$0xff] %v929
        %1200 = vst [vmem:[%s1134] ss:$9 sm:$0xff] %v930
        %1201 = vst [vmem:[%s1136] ss:$9 sm:$0xff] %v931
        %1202 = vst [vmem:[%s1138] ss:$9 sm:$0xff] %v932
        %v1203 = vld [vmem:[#allocation1] sm:$0xff]
        %1204 = vst [vmem:[#allocation1] ss:$9 sm:$0xff] %v933
        %1205 = vst [vmem:[%s1126] ss:$9 sm:$0xff] %v934
        %1206 = vst [vmem:[%s1128] ss:$9 sm:$0xff] %v935
        %1207 = vst [vmem:[%s1130] ss:$9 sm:$0xff] %v936
        %1208 = vst [vmem:[%s1132] ss:$9 sm:$0xff] %v937
        %1209 = vst [vmem:[%s1134] ss:$9 sm:$0xff] %v938
        %1210 = vst [vmem:[%s1136] ss:$9 sm:$0xff] %v939
        %1211 = vst [vmem:[%s1138] ss:$9 sm:$0xff] %v940
        %v1212 = vld [vmem:[#allocation1] sm:$0xff]
        %1213 = vst [vmem:[#allocation1] ss:$9 sm:$0xff] %v941
        %1214 = vst [vmem:[%s1126] ss:$9 sm:$0xff] %v942
        %1215 = vst [vmem:[%s1128] ss:$9 sm:$0xff] %v943
        %1216 = vst [vmem:[%s1130] ss:$9 sm:$0xff] %v944
        %1217 = vst [vmem:[%s1132] ss:$9 sm:$0xff] %v945
        %1218 = vst [vmem:[%s1134] ss:$9 sm:$0xff] %v946
        %1219 = vst [vmem:[%s1136] ss:$9 sm:$0xff] %v947
        %1220 = vst [vmem:[%s1138] ss:$9 sm:$0xff] %v948
        %v1221 = vld [vmem:[#allocation1] sm:$0xff]
        %1222 = vst [vmem:[#allocation1] ss:$9 sm:$0xff] %v949
        %1223 = vst [vmem:[%s1126] ss:$9 sm:$0xff] %v950
        %1224 = vst [vmem:[%s1128] ss:$9 sm:$0xff] %v951
        %1225 = vst [vmem:[%s1130] ss:$9 sm:$0xff] %v952
        %1226 = vst [vmem:[%s1132] ss:$9 sm:$0xff] %v953
        %1227 = vst [vmem:[%s1134] ss:$9 sm:$0xff] %v954
        %1228 = vst [vmem:[%s1136] ss:$9 sm:$0xff] %v955
        %1229 = vst [vmem:[%s1138] ss:$9 sm:$0xff] %v956
        %v1230 = vld [vmem:[#allocation1] sm:$0xff]
        %1231 = vst [vmem:[#allocation1] ss:$9 sm:$0xff] %v957
        %1232 = vst [vmem:[%s1126] ss:$9 sm:$0xff] %v958
        %1233 = vst [vmem:[%s1128] ss:$9 sm:$0xff] %v959
        %1234 = vst [vmem:[%s1130] ss:$9 sm:$0xff] %v960
        %1235 = vst [vmem:[%s1132] ss:$9 sm:$0xff] %v961
        %1236 = vst [vmem:[%s1134] ss:$9 sm:$0xff] %v962
        %1237 = vst [vmem:[%s1136] ss:$9 sm:$0xff] %v963
        %1238 = vst [vmem:[%s1138] ss:$9 sm:$0xff] %v964
        %v1239 = vld [vmem:[#allocation1] sm:$0xff]
        %1240 = vst [vmem:[#allocation1] ss:$9 sm:$0xff] %v965
        %1241 = vst [vmem:[%s1126] ss:$9 sm:$0xff] %v966
        %1242 = vst [vmem:[%s1128] ss:$9 sm:$0xff] %v967
        %1243 = vst [vmem:[%s1130] ss:$9 sm:$0xff] %v968
        %1244 = vst [vmem:[%s1132] ss:$9 sm:$0xff] %v969
        %1245 = vst [vmem:[%s1134] ss:$9 sm:$0xff] %v970
        %1246 = vst [vmem:[%s1136] ss:$9 sm:$0xff] %v971
        %1247 = vst [vmem:[%s1138] ss:$9 sm:$0xff] %v972
        %v1248 = vld [vmem:[#allocation1] sm:$0xff]
        %1249 = vst [vmem:[#allocation1] ss:$9 sm:$0xff] %v973
        %1250 = vst [vmem:[%s1126] ss:$9 sm:$0xff] %v974
        %1251 = vst [vmem:[%s1128] ss:$9 sm:$0xff] %v975
        %1252 = vst [vmem:[%s1130] ss:$9 sm:$0xff] %v976
        %1253 = vst [vmem:[%s1132] ss:$9 sm:$0xff] %v977
        %1254 = vst [vmem:[%s1134] ss:$9 sm:$0xff] %v978
        %1255 = vst [vmem:[%s1136] ss:$9 sm:$0xff] %v979
        %1256 = vst [vmem:[%s1138] ss:$9 sm:$0xff] %v980
        %v1257 = vld [vmem:[#allocation1] sm:$0xff]
        %1258 = vst [vmem:[#allocation1] ss:$9 sm:$0xff] %v981
        %1259 = vst [vmem:[%s1126] ss:$9 sm:$0xff] %v982
        %1260 = vst [vmem:[%s1128] ss:$9 sm:$0xff] %v983
        %1261 = vst [vmem:[%s1130] ss:$9 sm:$0xff] %v984
        %1262 = vst [vmem:[%s1132] ss:$9 sm:$0xff] %v985
        %1263 = vst [vmem:[%s1134] ss:$9 sm:$0xff] %v986
        %1264 = vst [vmem:[%s1136] ss:$9 sm:$0xff] %v987
        %1265 = vst [vmem:[%s1138] ss:$9 sm:$0xff] %v988
        %v1266 = vld [vmem:[#allocation1] sm:$0xff]
        %1267 = vst [vmem:[#allocation1] ss:$9 sm:$0xff] %v989
        %1268 = vst [vmem:[%s1126] ss:$9 sm:$0xff] %v990
        %1269 = vst [vmem:[%s1128] ss:$9 sm:$0xff] %v991
        %1270 = vst [vmem:[%s1130] ss:$9 sm:$0xff] %v992
        %1271 = vst [vmem:[%s1132] ss:$9 sm:$0xff] %v993
        %1272 = vst [vmem:[%s1134] ss:$9 sm:$0xff] %v994
        %1273 = vst [vmem:[%s1136] ss:$9 sm:$0xff] %v995
        %1274 = vst [vmem:[%s1138] ss:$9 sm:$0xff] %v996
        %v1275 = vld [vmem:[#allocation1] sm:$0xff]
        %1276 = vst [vmem:[#allocation1] ss:$9 sm:$0xff] %v997
        %1277 = vst [vmem:[%s1126] ss:$9 sm:$0xff] %v998
        %1278 = vst [vmem:[%s1128] ss:$9 sm:$0xff] %v999
        %1279 = vst [vmem:[%s1130] ss:$9 sm:$0xff] %v1000
        %1280 = vst [vmem:[%s1132] ss:$9 sm:$0xff] %v1001
        %1281 = vst [vmem:[%s1134] ss:$9 sm:$0xff] %v1002
        %1282 = vst [vmem:[%s1136] ss:$9 sm:$0xff] %v1003
        %1283 = vst [vmem:[%s1138] ss:$9 sm:$0xff] %v1004
        %v1284 = vld [vmem:[#allocation1] sm:$0xff]
        %1285 = vst [vmem:[#allocation1] ss:$9 sm:$0xff] %v1005
        %1286 = vst [vmem:[%s1126] ss:$9 sm:$0xff] %v1006
        %1287 = vst [vmem:[%s1128] ss:$9 sm:$0xff] %v1007
        %1288 = vst [vmem:[%s1130] ss:$9 sm:$0xff] %v1008
        %1289 = vst [vmem:[%s1132] ss:$9 sm:$0xff] %v1009
        %1290 = vst [vmem:[%s1134] ss:$9 sm:$0xff] %v1010
        %1291 = vst [vmem:[%s1136] ss:$9 sm:$0xff] %v1011
        %1292 = vst [vmem:[%s1138] ss:$9 sm:$0xff] %v1012
        %v1293 = vld [vmem:[#allocation1] sm:$0xff]
        %1294 = vst [vmem:[#allocation1] ss:$9 sm:$0xff] %v1013
        %1295 = vst [vmem:[%s1126] ss:$9 sm:$0xff] %v1014
        %1296 = vst [vmem:[%s1128] ss:$9 sm:$0xff] %v1015
        %1297 = vst [vmem:[%s1130] ss:$9 sm:$0xff] %v1016
        %1298 = vst [vmem:[%s1132] ss:$9 sm:$0xff] %v1017
        %1299 = vst [vmem:[%s1134] ss:$9 sm:$0xff] %v1018
        %1300 = vst [vmem:[%s1136] ss:$9 sm:$0xff] %v1019
        %1301 = vst [vmem:[%s1138] ss:$9 sm:$0xff] %v1020
        %v1302 = vld [vmem:[#allocation1] sm:$0xff]
        %1303 = vst [vmem:[#allocation1] ss:$9 sm:$0xff] %v1021
        %1304 = vst [vmem:[%s1126] ss:$9 sm:$0xff] %v1022
        %1305 = vst [vmem:[%s1128] ss:$9 sm:$0xff] %v1023
        %1306 = vst [vmem:[%s1130] ss:$9 sm:$0xff] %v1024
        %1307 = vst [vmem:[%s1132] ss:$9 sm:$0xff] %v1025
        %1308 = vst [vmem:[%s1134] ss:$9 sm:$0xff] %v1026
        %1309 = vst [vmem:[%s1136] ss:$9 sm:$0xff] %v1027
        %1310 = vst [vmem:[%s1138] ss:$9 sm:$0xff] %v1028
        %v1311 = vld [vmem:[#allocation1] sm:$0xff]
        %1312 = vst [vmem:[#allocation1] ss:$9 sm:$0xff] %v1029
        %1313 = vst [vmem:[%s1126] ss:$9 sm:$0xff] %v1030
        %1314 = vst [vmem:[%s1128] ss:$9 sm:$0xff] %v1031
        %1315 = vst [vmem:[%s1130] ss:$9 sm:$0xff] %v1032
        %1316 = vst [vmem:[%s1132] ss:$9 sm:$0xff] %v1033
        %1317 = vst [vmem:[%s1134] ss:$9 sm:$0xff] %v1034
        %1318 = vst [vmem:[%s1136] ss:$9 sm:$0xff] %v1035
        %1319 = vst [vmem:[%s1138] ss:$9 sm:$0xff] %v1036
        %v1320 = vld [vmem:[#allocation1] sm:$0xff]
        %1321 = vst [vmem:[#allocation1] ss:$9 sm:$0xff] %v1037
        %1322 = vst [vmem:[%s1126] ss:$9 sm:$0xff] %v1038
        %1323 = vst [vmem:[%s1128] ss:$9 sm:$0xff] %v1039
        %1324 = vst [vmem:[%s1130] ss:$9 sm:$0xff] %v1040
        %1325 = vst [vmem:[%s1132] ss:$9 sm:$0xff] %v1041
        %1326 = vst [vmem:[%s1134] ss:$9 sm:$0xff] %v1042
        %1327 = vst [vmem:[%s1136] ss:$9 sm:$0xff] %v1043
        %1328 = vst [vmem:[%s1138] ss:$9 sm:$0xff] %v1044
        %v1329 = vld [vmem:[#allocation1] sm:$0xff]
        %1330 = vst [vmem:[#allocation1] ss:$9 sm:$0xff] %v1045
        %1331 = vst [vmem:[%s1126] ss:$9 sm:$0xff] %v1046
        %1332 = vst [vmem:[%s1128] ss:$9 sm:$0xff] %v1047
        %1333 = vst [vmem:[%s1130] ss:$9 sm:$0xff] %v1048
        %1334 = vst [vmem:[%s1132] ss:$9 sm:$0xff] %v1049
        %1335 = vst [vmem:[%s1134] ss:$9 sm:$0xff] %v1050
        %1336 = vst [vmem:[%s1136] ss:$9 sm:$0xff] %v1051
        %1337 = vst [vmem:[%s1138] ss:$9 sm:$0xff] %v1052
        %v1338 = vld [vmem:[#allocation1] sm:$0xff]
        %1339 = vst [vmem:[#allocation1] ss:$9 sm:$0xff] %v1053
        %1340 = vst [vmem:[%s1126] ss:$9 sm:$0xff] %v1054
        %1341 = vst [vmem:[%s1128] ss:$9 sm:$0xff] %v1055
        %1342 = vst [vmem:[%s1130] ss:$9 sm:$0xff] %v1056
        %1343 = vst [vmem:[%s1132] ss:$9 sm:$0xff] %v1057
        %1344 = vst [vmem:[%s1134] ss:$9 sm:$0xff] %v1058
        %1345 = vst [vmem:[%s1136] ss:$9 sm:$0xff] %v1059
        %1346 = vst [vmem:[%s1138] ss:$9 sm:$0xff] %v1060
        %v1347 = vld [vmem:[#allocation1] sm:$0xff]
        %1348 = vst [vmem:[#allocation1] ss:$9 sm:$0xff] %v1061
        %1349 = vst [vmem:[%s1126] ss:$9 sm:$0xff] %v1062
        %1350 = vst [vmem:[%s1128] ss:$9 sm:$0xff] %v1063
        %1351 = vst [vmem:[%s1130] ss:$9 sm:$0xff] %v1064
        %1352 = vst [vmem:[%s1132] ss:$9 sm:$0xff] %v1065
        %1353 = vst [vmem:[%s1134] ss:$9 sm:$0xff] %v1066
        %1354 = vst [vmem:[%s1136] ss:$9 sm:$0xff] %v1067
        %1355 = vst [vmem:[%s1138] ss:$9 sm:$0xff] %v1068
        %v1356 = vld [vmem:[#allocation1] sm:$0xff]
        %1357 = vst [vmem:[#allocation1] ss:$9 sm:$0xff] %v1069
        %1358 = vst [vmem:[%s1126] ss:$9 sm:$0xff] %v1070
        %1359 = vst [vmem:[%s1128] ss:$9 sm:$0xff] %v1071
        %1360 = vst [vmem:[%s1130] ss:$9 sm:$0xff] %v1072
        %1361 = vst [vmem:[%s1132] ss:$9 sm:$0xff] %v1073
        %1362 = vst [vmem:[%s1134] ss:$9 sm:$0xff] %v1074
        %1363 = vst [vmem:[%s1136] ss:$9 sm:$0xff] %v1075
        %1364 = vst [vmem:[%s1138] ss:$9 sm:$0xff] %v1076
        %v1365 = vld [vmem:[#allocation1] sm:$0xff]
        %1366 = vst [vmem:[#allocation1] ss:$9 sm:$0xff] %v1077
        %1367 = vst [vmem:[%s1126] ss:$9 sm:$0xff] %v1078
        %1368 = vst [vmem:[%s1128] ss:$9 sm:$0xff] %v1079
        %1369 = vst [vmem:[%s1130] ss:$9 sm:$0xff] %v1080
        %1370 = vst [vmem:[%s1132] ss:$9 sm:$0xff] %v1081
        %1371 = vst [vmem:[%s1134] ss:$9 sm:$0xff] %v1082
        %1372 = vst [vmem:[%s1136] ss:$9 sm:$0xff] %v1083
        %1373 = vst [vmem:[%s1138] ss:$9 sm:$0xff] %v1084
        %v1374 = vld [vmem:[#allocation1] sm:$0xff]
        %1375 = vst [vmem:[#allocation1] ss:$9 sm:$0xff] %v1085
        %1376 = vst [vmem:[%s1126] ss:$9 sm:$0xff] %v1086
        %1377 = vst [vmem:[%s1128] ss:$9 sm:$0xff] %v1087
        %1378 = vst [vmem:[%s1130] ss:$9 sm:$0xff] %v1088
        %1379 = vst [vmem:[%s1132] ss:$9 sm:$0xff] %v1089
        %1380 = vst [vmem:[%s1134] ss:$9 sm:$0xff] %v1090
        %1381 = vst [vmem:[%s1136] ss:$9 sm:$0xff] %v1091
        %1382 = vst [vmem:[%s1138] ss:$9 sm:$0xff] %v1092
        %v1383 = vld [vmem:[#allocation1] sm:$0xff]
        %1384 = vst [vmem:[#allocation1] ss:$9 sm:$0xff] %v1093
        %1385 = vst [vmem:[%s1126] ss:$9 sm:$0xff] %v1094
        %1386 = vst [vmem:[%s1128] ss:$9 sm:$0xff] %v1095
        %1387 = vst [vmem:[%s1130] ss:$9 sm:$0xff] %v1096
        %1388 = vst [vmem:[%s1132] ss:$9 sm:$0xff] %v1097
        %1389 = vst [vmem:[%s1134] ss:$9 sm:$0xff] %v1098
        %1390 = vst [vmem:[%s1136] ss:$9 sm:$0xff] %v1099
        %1391 = vst [vmem:[%s1138] ss:$9 sm:$0xff] %v1100
        %v1392 = vld [vmem:[#allocation1] sm:$0xff]
        %1393 = vst [vmem:[#allocation1] ss:$9 sm:$0xff] %v1101
        %1394 = vst [vmem:[%s1126] ss:$9 sm:$0xff] %v1102
        %1395 = vst [vmem:[%s1128] ss:$9 sm:$0xff] %v1103
        %1396 = vst [vmem:[%s1130] ss:$9 sm:$0xff] %v1104
        %1397 = vst [vmem:[%s1132] ss:$9 sm:$0xff] %v1105
        %1398 = vst [vmem:[%s1134] ss:$9 sm:$0xff] %v1106
        %1399 = vst [vmem:[%s1136] ss:$9 sm:$0xff] %v1107
        %1400 = vst [vmem:[%s1138] ss:$9 sm:$0xff] %v1108
        %v1401 = vld [vmem:[#allocation1] sm:$0xff]
        %1402 = vst [vmem:[#allocation1] ss:$9 sm:$0xff] %v1109
        %1403 = vst [vmem:[%s1126] ss:$9 sm:$0xff] %v1110
        %1404 = vst [vmem:[%s1128] ss:$9 sm:$0xff] %v1111
        %1405 = vst [vmem:[%s1130] ss:$9 sm:$0xff] %v1112
        %1406 = vst [vmem:[%s1132] ss:$9 sm:$0xff] %v1113
        %1407 = vst [vmem:[%s1134] ss:$9 sm:$0xff] %v1114
        %1408 = vst [vmem:[%s1136] ss:$9 sm:$0xff] %v1115
        %1409 = vst [vmem:[%s1138] ss:$9 sm:$0xff] %v1116
        %v1410 = vld [vmem:[#allocation1] sm:$0xff]
        %1411 = vst [vmem:[#allocation1] ss:$9 sm:$0xff] %v1117
        %1412 = vst [vmem:[%s1126] ss:$9 sm:$0xff] %v1118
        %1413 = vst [vmem:[%s1128] ss:$9 sm:$0xff] %v1119
        %1414 = vst [vmem:[%s1130] ss:$9 sm:$0xff] %v1120
        %1415 = vst [vmem:[%s1132] ss:$9 sm:$0xff] %v1121
        %1416 = vst [vmem:[%s1134] ss:$9 sm:$0xff] %v1122
        %1417 = vst [vmem:[%s1136] ss:$9 sm:$0xff] %v1123
        %1418 = vst [vmem:[%s1138] ss:$9 sm:$0xff] %v1124
        %v1419 = vld [vmem:[#allocation1] sm:$0xff]
        %1420 = vset.pattern.permute.xlu0 0
        %1421 = vperm.xlu0 %1420, %v1140
        %v1422 = vpop.permute.xlu0 %1421
        %1423 = vset.pattern.permute.xlu0 0
        %1424 = vperm.xlu0 %1423, %v1149
        %v1425 = vpop.permute.xlu0 %1424
        %1426 = vset.pattern.permute.xlu0 0
        %1427 = vperm.xlu0 %1426, %v1158
        %v1428 = vpop.permute.xlu0 %1427
        %1429 = vset.pattern.permute.xlu0 0
        %1430 = vperm.xlu0 %1429, %v1167
        %v1431 = vpop.permute.xlu0 %1430
        %1432 = vset.pattern.permute.xlu0 0
        %1433 = vperm.xlu0 %1432, %v1176
        %v1434 = vpop.permute.xlu0 %1433
        %1435 = vset.pattern.permute.xlu0 0
        %1436 = vperm.xlu0 %1435, %v1185
        %v1437 = vpop.permute.xlu0 %1436
        %1438 = vset.pattern.permute.xlu0 0
        %1439 = vperm.xlu0 %1438, %v1194
        %v1440 = vpop.permute.xlu0 %1439
        %1441 = vset.pattern.permute.xlu0 0
        %1442 = vperm.xlu0 %1441, %v1203
        %v1443 = vpop.permute.xlu0 %1442
        %1444 = vset.pattern.permute.xlu0 0
        %1445 = vperm.xlu0 %1444, %v1212
        %v1446 = vpop.permute.xlu0 %1445
        %1447 = vset.pattern.permute.xlu0 0
        %1448 = vperm.xlu0 %1447, %v1221
        %v1449 = vpop.permute.xlu0 %1448
        %1450 = vset.pattern.permute.xlu0 0
        %1451 = vperm.xlu0 %1450, %v1230
        %v1452 = vpop.permute.xlu0 %1451
        %1453 = vset.pattern.permute.xlu0 0
        %1454 = vperm.xlu0 %1453, %v1239
        %v1455 = vpop.permute.xlu0 %1454
        %1456 = vset.pattern.permute.xlu0 0
        %1457 = vperm.xlu0 %1456, %v1248
        %v1458 = vpop.permute.xlu0 %1457
        %1459 = vset.pattern.permute.xlu0 0
        %1460 = vperm.xlu0 %1459, %v1257
        %v1461 = vpop.permute.xlu0 %1460
        %1462 = vset.pattern.permute.xlu0 0
        %1463 = vperm.xlu0 %1462, %v1266
        %v1464 = vpop.permute.xlu0 %1463
        %1465 = vset.pattern.permute.xlu0 0
        %1466 = vperm.xlu0 %1465, %v1275
        %v1467 = vpop.permute.xlu0 %1466
        %1468 = vset.pattern.permute.xlu0 0
        %1469 = vperm.xlu0 %1468, %v1284
        %v1470 = vpop.permute.xlu0 %1469
        %1471 = vset.pattern.permute.xlu0 0
        %1472 = vperm.xlu0 %1471, %v1293
        %v1473 = vpop.permute.xlu0 %1472
        %1474 = vset.pattern.permute.xlu0 0
        %1475 = vperm.xlu0 %1474, %v1302
        %v1476 = vpop.permute.xlu0 %1475
        %1477 = vset.pattern.permute.xlu0 0
        %1478 = vperm.xlu0 %1477, %v1311
        %v1479 = vpop.permute.xlu0 %1478
        %1480 = vset.pattern.permute.xlu0 0
        %1481 = vperm.xlu0 %1480, %v1320
        %v1482 = vpop.permute.xlu0 %1481
        %1483 = vset.pattern.permute.xlu0 0
        %1484 = vperm.xlu0 %1483, %v1329
        %v1485 = vpop.permute.xlu0 %1484
        %1486 = vset.pattern.permute.xlu0 0
        %1487 = vperm.xlu0 %1486, %v1338
        %v1488 = vpop.permute.xlu0 %1487
        %1489 = vset.pattern.permute.xlu0 0
        %1490 = vperm.xlu0 %1489, %v1347
        %v1491 = vpop.permute.xlu0 %1490
        %1492 = vset.pattern.permute.xlu0 0
        %1493 = vperm.xlu0 %1492, %v1356
        %v1494 = vpop.permute.xlu0 %1493
        %1495 = vset.pattern.permute.xlu0 0
        %1496 = vperm.xlu0 %1495, %v1365
        %v1497 = vpop.permute.xlu0 %1496
        %1498 = vset.pattern.permute.xlu0 0
        %1499 = vperm.xlu0 %1498, %v1374
        %v1500 = vpop.permute.xlu0 %1499
        %1501 = vset.pattern.permute.xlu0 0
        %1502 = vperm.xlu0 %1501, %v1383
        %v1503 = vpop.permute.xlu0 %1502
        %1504 = vset.pattern.permute.xlu0 0
        %1505 = vperm.xlu0 %1504, %v1392
        %v1506 = vpop.permute.xlu0 %1505
        %1507 = vset.pattern.permute.xlu0 0
        %1508 = vperm.xlu0 %1507, %v1401
        %v1509 = vpop.permute.xlu0 %1508
        %1510 = vset.pattern.permute.xlu0 0
        %1511 = vperm.xlu0 %1510, %v1410
        %v1512 = vpop.permute.xlu0 %1511
        %1513 = vset.pattern.permute.xlu0 0
        %1514 = vperm.xlu0 %1513, %v1419
        %v1515 = vpop.permute.xlu0 %1514
        %v1516 = vlaneseq
        %v1517 = vand.u32 %v1516, 127
        %v1518 = vperm.slane %v1422, %v1517
        %v1519 = vadd.s32 %v1517, 4294967288
        %v1520 = vperm.slane %v1425, %v1519
        %vm1521 = vcmask 130112
        %v1522 = vsel %vm1521, %v1520, %v1518
        %v1523 = vadd.s32 %v1517, 4294967280
        %v1524 = vperm.slane %v1428, %v1523
        %vm1525 = vcmask 195712
        %v1526 = vsel %vm1525, %v1524, %v1522
        %v1527 = vadd.s32 %v1517, 4294967272
        %v1528 = vperm.slane %v1431, %v1527
        %vm1529 = vcmask 261312
        %v1530 = vsel %vm1529, %v1528, %v1526
        %v1531 = vadd.s32 %v1517, 4294967264
        %v1532 = vperm.slane %v1434, %v1531
        %vm1533 = vcmask 326912
        %v1534 = vsel %vm1533, %v1532, %v1530
        %v1535 = vadd.s32 %v1517, 4294967256
        %v1536 = vperm.slane %v1437, %v1535
        %vm1537 = vcmask 392512
        %v1538 = vsel %vm1537, %v1536, %v1534
        %v1539 = vadd.s32 %v1517, 4294967248
        %v1540 = vperm.slane %v1440, %v1539
        %vm1541 = vcmask 458112
        %v1542 = vsel %vm1541, %v1540, %v1538
        %v1543 = vadd.s32 %v1517, 4294967240
        %v1544 = vperm.slane %v1443, %v1543
        %vm1545 = vcmask 523712
        %v1546 = vsel %vm1545, %v1544, %v1542
        %v1547 = vadd.s32 %v1517, 4294967232
        %v1548 = vperm.slane %v1446, %v1547
        %vm1549 = vcmask 589312
        %v1550 = vsel %vm1549, %v1548, %v1546
        %v1551 = vadd.s32 %v1517, 4294967224
        %v1552 = vperm.slane %v1449, %v1551
        %vm1553 = vcmask 654912
        %v1554 = vsel %vm1553, %v1552, %v1550
        %v1555 = vadd.s32 %v1517, 4294967216
        %v1556 = vperm.slane %v1452, %v1555
        %vm1557 = vcmask 720512
        %v1558 = vsel %vm1557, %v1556, %v1554
        %v1559 = vadd.s32 %v1517, 4294967208
        %v1560 = vperm.slane %v1455, %v1559
        %vm1561 = vcmask 786112
        %v1562 = vsel %vm1561, %v1560, %v1558
        %v1563 = vadd.s32 %v1517, 4294967200
        %v1564 = vperm.slane %v1458, %v1563
        %vm1565 = vcmask 851712
        %v1566 = vsel %vm1565, %v1564, %v1562
        %v1567 = vadd.s32 %v1517, 4294967192
        %v1568 = vperm.slane %v1461, %v1567
        %vm1569 = vcmask 917312
        %v1570 = vsel %vm1569, %v1568, %v1566
        %v1571 = vadd.s32 %v1517, 4294967184
        %v1572 = vperm.slane %v1464, %v1571
        %vm1573 = vcmask 982912
        %v1574 = vsel %vm1573, %v1572, %v1570
        %v1575 = vadd.s32 %v1517, 4294967176
        %v1576 = vperm.slane %v1467, %v1575
        %vm1577 = vcmask 1048512
        %v1578 = vsel %vm1577, %v1576, %v1574
        %v1579 = vperm.slane %v1470, %v1517
        %v1580 = vperm.slane %v1473, %v1519
        %v1581 = vsel %vm1521, %v1580, %v1579
        %v1582 = vperm.slane %v1476, %v1523
        %v1583 = vsel %vm1525, %v1582, %v1581
        %v1584 = vperm.slane %v1479, %v1527
        %v1585 = vsel %vm1529, %v1584, %v1583
        %v1586 = vperm.slane %v1482, %v1531
        %v1587 = vsel %vm1533, %v1586, %v1585
        %v1588 = vperm.slane %v1485, %v1535
        %v1589 = vsel %vm1537, %v1588, %v1587
        %v1590 = vperm.slane %v1488, %v1539
        %v1591 = vsel %vm1541, %v1590, %v1589
        %v1592 = vperm.slane %v1491, %v1543
        %v1593 = vsel %vm1545, %v1592, %v1591
        %v1594 = vperm.slane %v1494, %v1547
        %v1595 = vsel %vm1549, %v1594, %v1593
        %v1596 = vperm.slane %v1497, %v1551
        %v1597 = vsel %vm1553, %v1596, %v1595
        %v1598 = vperm.slane %v1500, %v1555
        %v1599 = vsel %vm1557, %v1598, %v1597
        %v1600 = vperm.slane %v1503, %v1559
        %v1601 = vsel %vm1561, %v1600, %v1599
        %v1602 = vperm.slane %v1506, %v1563
        %v1603 = vsel %vm1565, %v1602, %v1601
        %v1604 = vperm.slane %v1509, %v1567
        %v1605 = vsel %vm1569, %v1604, %v1603
        %v1606 = vperm.slane %v1512, %v1571
        %v1607 = vsel %vm1573, %v1606, %v1605
        %v1608 = vperm.slane %v1515, %v1575
        %v1609 = vsel %vm1577, %v1608, %v1607
        %v1610 = vrot.slane %v1609, 7
        %vm1611 = vcmask 1040384
        %v1612 = vsel %vm1611, %v1578, %v1610
        %v1613 = vlaneseq
        %vm1614 = vcmp.ge.s32.totalorder %v1613, 0
        %vm1615 = vcmp.lt.s32.totalorder %v1613, 256
        %vm1616 = vmand %vm1614, %vm1615
        %1617 = vst.msk [vmem:[%s255] sm:$0x3] %vm1616, %v1612
        %1618 = vmin.xlane.f32.xlu0 %v773
        %v1619 = vpop.xlane.xlu0 %1618
        %1620 = vmin.xlane.f32.xlu0 %v776
        %v1621 = vpop.xlane.xlu0 %1620
        %1622 = vmin.xlane.f32.xlu0 %v779
        %v1623 = vpop.xlane.xlu0 %1622
        %1624 = vmin.xlane.f32.xlu0 %v782
        %v1625 = vpop.xlane.xlu0 %1624
        %1626 = vmin.xlane.f32.xlu0 %v785
        %v1627 = vpop.xlane.xlu0 %1626
        %1628 = vmin.xlane.f32.xlu0 %v788
        %v1629 = vpop.xlane.xlu0 %1628
        %1630 = vmin.xlane.f32.xlu0 %v791
        %v1631 = vpop.xlane.xlu0 %1630
        %1632 = vmin.xlane.f32.xlu0 %v794
        %v1633 = vpop.xlane.xlu0 %1632
        %1634 = vmin.xlane.f32.xlu0 %v797
        %v1635 = vpop.xlane.xlu0 %1634
        %1636 = vmin.xlane.f32.xlu0 %v800
        %v1637 = vpop.xlane.xlu0 %1636
        %1638 = vmin.xlane.f32.xlu0 %v803
        %v1639 = vpop.xlane.xlu0 %1638
        %1640 = vmin.xlane.f32.xlu0 %v806
        %v1641 = vpop.xlane.xlu0 %1640
        %1642 = vmin.xlane.f32.xlu0 %v809
        %v1643 = vpop.xlane.xlu0 %1642
        %1644 = vmin.xlane.f32.xlu0 %v812
        %v1645 = vpop.xlane.xlu0 %1644
        %1646 = vmin.xlane.f32.xlu0 %v815
        %v1647 = vpop.xlane.xlu0 %1646
        %1648 = vmin.xlane.f32.xlu0 %v818
        %v1649 = vpop.xlane.xlu0 %1648
        %1650 = vmin.xlane.f32.xlu0 %v821
        %v1651 = vpop.xlane.xlu0 %1650
        %1652 = vmin.xlane.f32.xlu0 %v824
        %v1653 = vpop.xlane.xlu0 %1652
        %1654 = vmin.xlane.f32.xlu0 %v827
        %v1655 = vpop.xlane.xlu0 %1654
        %1656 = vmin.xlane.f32.xlu0 %v830
        %v1657 = vpop.xlane.xlu0 %1656
        %1658 = vmin.xlane.f32.xlu0 %v833
        %v1659 = vpop.xlane.xlu0 %1658
        %1660 = vmin.xlane.f32.xlu0 %v836
        %v1661 = vpop.xlane.xlu0 %1660
        %1662 = vmin.xlane.f32.xlu0 %v839
        %v1663 = vpop.xlane.xlu0 %1662
        %1664 = vmin.xlane.f32.xlu0 %v842
        %v1665 = vpop.xlane.xlu0 %1664
        %1666 = vmin.xlane.f32.xlu0 %v845
        %v1667 = vpop.xlane.xlu0 %1666
        %1668 = vmin.xlane.f32.xlu0 %v848
        %v1669 = vpop.xlane.xlu0 %1668
        %1670 = vmin.xlane.f32.xlu0 %v851
        %v1671 = vpop.xlane.xlu0 %1670
        %1672 = vmin.xlane.f32.xlu0 %v854
        %v1673 = vpop.xlane.xlu0 %1672
        %1674 = vmin.xlane.f32.xlu0 %v857
        %v1675 = vpop.xlane.xlu0 %1674
        %1676 = vmin.xlane.f32.xlu0 %v860
        %v1677 = vpop.xlane.xlu0 %1676
        %1678 = vmin.xlane.f32.xlu0 %v863
        %v1679 = vpop.xlane.xlu0 %1678
        %1680 = vmin.xlane.f32.xlu0 %v866
        %v1681 = vpop.xlane.xlu0 %1680
        %v1682 = vmax.f32 %v1619, 0.0
        %v1683 = vmax.f32 %v1621, 0.0
        %v1684 = vmax.f32 %v1623, 0.0
        %v1685 = vmax.f32 %v1625, 0.0
        %v1686 = vmax.f32 %v1627, 0.0
        %v1687 = vmax.f32 %v1629, 0.0
        %v1688 = vmax.f32 %v1631, 0.0
        %v1689 = vmax.f32 %v1633, 0.0
        %v1690 = vmax.f32 %v1635, 0.0
        %v1691 = vmax.f32 %v1637, 0.0
        %v1692 = vmax.f32 %v1639, 0.0
        %v1693 = vmax.f32 %v1641, 0.0
        %v1694 = vmax.f32 %v1643, 0.0
        %v1695 = vmax.f32 %v1645, 0.0
        %v1696 = vmax.f32 %v1647, 0.0
        %v1697 = vmax.f32 %v1649, 0.0
        %v1698 = vmax.f32 %v1651, 0.0
        %v1699 = vmax.f32 %v1653, 0.0
        %v1700 = vmax.f32 %v1655, 0.0
        %v1701 = vmax.f32 %v1657, 0.0
        %v1702 = vmax.f32 %v1659, 0.0
        %v1703 = vmax.f32 %v1661, 0.0
        %v1704 = vmax.f32 %v1663, 0.0
        %v1705 = vmax.f32 %v1665, 0.0
        %v1706 = vmax.f32 %v1667, 0.0
        %v1707 = vmax.f32 %v1669, 0.0
        %v1708 = vmax.f32 %v1671, 0.0
        %v1709 = vmax.f32 %v1673, 0.0
        %v1710 = vmax.f32 %v1675, 0.0
        %v1711 = vmax.f32 %v1677, 0.0
        %v1712 = vmax.f32 %v1679, 0.0
        %v1713 = vmax.f32 %v1681, 0.0
        %v1746 = vperm.slane %v1682, 0
        %v1747 = vperm.slane %v1682, 1
        %v1748 = vperm.slane %v1682, 2
        %v1749 = vperm.slane %v1682, 3
        %v1750 = vperm.slane %v1682, 4
        %v1751 = vperm.slane %v1682, 5
        %v1752 = vperm.slane %v1682, 6
        %v1753 = vperm.slane %v1682, 7
        %v1754 = vperm.slane %v1683, 0
        %v1755 = vperm.slane %v1683, 1
        %v1756 = vperm.slane %v1683, 2
        %v1757 = vperm.slane %v1683, 3
        %v1758 = vperm.slane %v1683, 4
        %v1759 = vperm.slane %v1683, 5
        %v1760 = vperm.slane %v1683, 6
        %v1761 = vperm.slane %v1683, 7
        %v1762 = vperm.slane %v1684, 0
        %v1763 = vperm.slane %v1684, 1
        %v1764 = vperm.slane %v1684, 2
        %v1765 = vperm.slane %v1684, 3
        %v1766 = vperm.slane %v1684, 4
        %v1767 = vperm.slane %v1684, 5
        %v1768 = vperm.slane %v1684, 6
        %v1769 = vperm.slane %v1684, 7
        %v1770 = vperm.slane %v1685, 0
        %v1771 = vperm.slane %v1685, 1
        %v1772 = vperm.slane %v1685, 2
        %v1773 = vperm.slane %v1685, 3
        %v1774 = vperm.slane %v1685, 4
        %v1775 = vperm.slane %v1685, 5
        %v1776 = vperm.slane %v1685, 6
        %v1777 = vperm.slane %v1685, 7
        %v1778 = vperm.slane %v1686, 0
        %v1779 = vperm.slane %v1686, 1
        %v1780 = vperm.slane %v1686, 2
        %v1781 = vperm.slane %v1686, 3
        %v1782 = vperm.slane %v1686, 4
        %v1783 = vperm.slane %v1686, 5
        %v1784 = vperm.slane %v1686, 6
        %v1785 = vperm.slane %v1686, 7
        %v1786 = vperm.slane %v1687, 0
        %v1787 = vperm.slane %v1687, 1
        %v1788 = vperm.slane %v1687, 2
        %v1789 = vperm.slane %v1687, 3
        %v1790 = vperm.slane %v1687, 4
        %v1791 = vperm.slane %v1687, 5
        %v1792 = vperm.slane %v1687, 6
        %v1793 = vperm.slane %v1687, 7
        %v1794 = vperm.slane %v1688, 0
        %v1795 = vperm.slane %v1688, 1
        %v1796 = vperm.slane %v1688, 2
        %v1797 = vperm.slane %v1688, 3
        %v1798 = vperm.slane %v1688, 4
        %v1799 = vperm.slane %v1688, 5
        %v1800 = vperm.slane %v1688, 6
        %v1801 = vperm.slane %v1688, 7
        %v1802 = vperm.slane %v1689, 0
        %v1803 = vperm.slane %v1689, 1
        %v1804 = vperm.slane %v1689, 2
        %v1805 = vperm.slane %v1689, 3
        %v1806 = vperm.slane %v1689, 4
        %v1807 = vperm.slane %v1689, 5
        %v1808 = vperm.slane %v1689, 6
        %v1809 = vperm.slane %v1689, 7
        %v1810 = vperm.slane %v1690, 0
        %v1811 = vperm.slane %v1690, 1
        %v1812 = vperm.slane %v1690, 2
        %v1813 = vperm.slane %v1690, 3
        %v1814 = vperm.slane %v1690, 4
        %v1815 = vperm.slane %v1690, 5
        %v1816 = vperm.slane %v1690, 6
        %v1817 = vperm.slane %v1690, 7
        %v1818 = vperm.slane %v1691, 0
        %v1819 = vperm.slane %v1691, 1
        %v1820 = vperm.slane %v1691, 2
        %v1821 = vperm.slane %v1691, 3
        %v1822 = vperm.slane %v1691, 4
        %v1823 = vperm.slane %v1691, 5
        %v1824 = vperm.slane %v1691, 6
        %v1825 = vperm.slane %v1691, 7
        %v1826 = vperm.slane %v1692, 0
        %v1827 = vperm.slane %v1692, 1
        %v1828 = vperm.slane %v1692, 2
        %v1829 = vperm.slane %v1692, 3
        %v1830 = vperm.slane %v1692, 4
        %v1831 = vperm.slane %v1692, 5
        %v1832 = vperm.slane %v1692, 6
        %v1833 = vperm.slane %v1692, 7
        %v1834 = vperm.slane %v1693, 0
        %v1835 = vperm.slane %v1693, 1
        %v1836 = vperm.slane %v1693, 2
        %v1837 = vperm.slane %v1693, 3
        %v1838 = vperm.slane %v1693, 4
        %v1839 = vperm.slane %v1693, 5
        %v1840 = vperm.slane %v1693, 6
        %v1841 = vperm.slane %v1693, 7
        %v1842 = vperm.slane %v1694, 0
        %v1843 = vperm.slane %v1694, 1
        %v1844 = vperm.slane %v1694, 2
        %v1845 = vperm.slane %v1694, 3
        %v1846 = vperm.slane %v1694, 4
        %v1847 = vperm.slane %v1694, 5
        %v1848 = vperm.slane %v1694, 6
        %v1849 = vperm.slane %v1694, 7
        %v1850 = vperm.slane %v1695, 0
        %v1851 = vperm.slane %v1695, 1
        %v1852 = vperm.slane %v1695, 2
        %v1853 = vperm.slane %v1695, 3
        %v1854 = vperm.slane %v1695, 4
        %v1855 = vperm.slane %v1695, 5
        %v1856 = vperm.slane %v1695, 6
        %v1857 = vperm.slane %v1695, 7
        %v1858 = vperm.slane %v1696, 0
        %v1859 = vperm.slane %v1696, 1
        %v1860 = vperm.slane %v1696, 2
        %v1861 = vperm.slane %v1696, 3
        %v1862 = vperm.slane %v1696, 4
        %v1863 = vperm.slane %v1696, 5
        %v1864 = vperm.slane %v1696, 6
        %v1865 = vperm.slane %v1696, 7
        %v1866 = vperm.slane %v1697, 0
        %v1867 = vperm.slane %v1697, 1
        %v1868 = vperm.slane %v1697, 2
        %v1869 = vperm.slane %v1697, 3
        %v1870 = vperm.slane %v1697, 4
        %v1871 = vperm.slane %v1697, 5
        %v1872 = vperm.slane %v1697, 6
        %v1873 = vperm.slane %v1697, 7
        %v1874 = vperm.slane %v1698, 0
        %v1875 = vperm.slane %v1698, 1
        %v1876 = vperm.slane %v1698, 2
        %v1877 = vperm.slane %v1698, 3
        %v1878 = vperm.slane %v1698, 4
        %v1879 = vperm.slane %v1698, 5
        %v1880 = vperm.slane %v1698, 6
        %v1881 = vperm.slane %v1698, 7
        %v1882 = vperm.slane %v1699, 0
        %v1883 = vperm.slane %v1699, 1
        %v1884 = vperm.slane %v1699, 2
        %v1885 = vperm.slane %v1699, 3
        %v1886 = vperm.slane %v1699, 4
        %v1887 = vperm.slane %v1699, 5
        %v1888 = vperm.slane %v1699, 6
        %v1889 = vperm.slane %v1699, 7
        %v1890 = vperm.slane %v1700, 0
        %v1891 = vperm.slane %v1700, 1
        %v1892 = vperm.slane %v1700, 2
        %v1893 = vperm.slane %v1700, 3
        %v1894 = vperm.slane %v1700, 4
        %v1895 = vperm.slane %v1700, 5
        %v1896 = vperm.slane %v1700, 6
        %v1897 = vperm.slane %v1700, 7
        %v1898 = vperm.slane %v1701, 0
        %v1899 = vperm.slane %v1701, 1
        %v1900 = vperm.slane %v1701, 2
        %v1901 = vperm.slane %v1701, 3
        %v1902 = vperm.slane %v1701, 4
        %v1903 = vperm.slane %v1701, 5
        %v1904 = vperm.slane %v1701, 6
        %v1905 = vperm.slane %v1701, 7
        %v1906 = vperm.slane %v1702, 0
        %v1907 = vperm.slane %v1702, 1
        %v1908 = vperm.slane %v1702, 2
        %v1909 = vperm.slane %v1702, 3
        %v1910 = vperm.slane %v1702, 4
        %v1911 = vperm.slane %v1702, 5
        %v1912 = vperm.slane %v1702, 6
        %v1913 = vperm.slane %v1702, 7
        %v1914 = vperm.slane %v1703, 0
        %v1915 = vperm.slane %v1703, 1
        %v1916 = vperm.slane %v1703, 2
        %v1917 = vperm.slane %v1703, 3
        %v1918 = vperm.slane %v1703, 4
        %v1919 = vperm.slane %v1703, 5
        %v1920 = vperm.slane %v1703, 6
        %v1921 = vperm.slane %v1703, 7
        %v1922 = vperm.slane %v1704, 0
        %v1923 = vperm.slane %v1704, 1
        %v1924 = vperm.slane %v1704, 2
        %v1925 = vperm.slane %v1704, 3
        %v1926 = vperm.slane %v1704, 4
        %v1927 = vperm.slane %v1704, 5
        %v1928 = vperm.slane %v1704, 6
        %v1929 = vperm.slane %v1704, 7
        %v1930 = vperm.slane %v1705, 0
        %v1931 = vperm.slane %v1705, 1
        %v1932 = vperm.slane %v1705, 2
        %v1933 = vperm.slane %v1705, 3
        %v1934 = vperm.slane %v1705, 4
        %v1935 = vperm.slane %v1705, 5
        %v1936 = vperm.slane %v1705, 6
        %v1937 = vperm.slane %v1705, 7
        %v1938 = vperm.slane %v1706, 0
        %v1939 = vperm.slane %v1706, 1
        %v1940 = vperm.slane %v1706, 2
        %v1941 = vperm.slane %v1706, 3
        %v1942 = vperm.slane %v1706, 4
        %v1943 = vperm.slane %v1706, 5
        %v1944 = vperm.slane %v1706, 6
        %v1945 = vperm.slane %v1706, 7
        %v1946 = vperm.slane %v1707, 0
        %v1947 = vperm.slane %v1707, 1
        %v1948 = vperm.slane %v1707, 2
        %v1949 = vperm.slane %v1707, 3
        %v1950 = vperm.slane %v1707, 4
        %v1951 = vperm.slane %v1707, 5
        %v1952 = vperm.slane %v1707, 6
        %v1953 = vperm.slane %v1707, 7
        %v1954 = vperm.slane %v1708, 0
        %v1955 = vperm.slane %v1708, 1
        %v1956 = vperm.slane %v1708, 2
        %v1957 = vperm.slane %v1708, 3
        %v1958 = vperm.slane %v1708, 4
        %v1959 = vperm.slane %v1708, 5
        %v1960 = vperm.slane %v1708, 6
        %v1961 = vperm.slane %v1708, 7
        %v1962 = vperm.slane %v1709, 0
        %v1963 = vperm.slane %v1709, 1
        %v1964 = vperm.slane %v1709, 2
        %v1965 = vperm.slane %v1709, 3
        %v1966 = vperm.slane %v1709, 4
        %v1967 = vperm.slane %v1709, 5
        %v1968 = vperm.slane %v1709, 6
        %v1969 = vperm.slane %v1709, 7
        %v1970 = vperm.slane %v1710, 0
        %v1971 = vperm.slane %v1710, 1
        %v1972 = vperm.slane %v1710, 2
        %v1973 = vperm.slane %v1710, 3
        %v1974 = vperm.slane %v1710, 4
        %v1975 = vperm.slane %v1710, 5
        %v1976 = vperm.slane %v1710, 6
        %v1977 = vperm.slane %v1710, 7
        %v1978 = vperm.slane %v1711, 0
        %v1979 = vperm.slane %v1711, 1
        %v1980 = vperm.slane %v1711, 2
        %v1981 = vperm.slane %v1711, 3
        %v1982 = vperm.slane %v1711, 4
        %v1983 = vperm.slane %v1711, 5
        %v1984 = vperm.slane %v1711, 6
        %v1985 = vperm.slane %v1711, 7
        %v1986 = vperm.slane %v1712, 0
        %v1987 = vperm.slane %v1712, 1
        %v1988 = vperm.slane %v1712, 2
        %v1989 = vperm.slane %v1712, 3
        %v1990 = vperm.slane %v1712, 4
        %v1991 = vperm.slane %v1712, 5
        %v1992 = vperm.slane %v1712, 6
        %v1993 = vperm.slane %v1712, 7
        %v1994 = vperm.slane %v1713, 0
        %v1995 = vperm.slane %v1713, 1
        %v1996 = vperm.slane %v1713, 2
        %v1997 = vperm.slane %v1713, 3
        %v1998 = vperm.slane %v1713, 4
        %v1999 = vperm.slane %v1713, 5
        %v2000 = vperm.slane %v1713, 6
        %v2001 = vperm.slane %v1713, 7
        %2002 = vst [vmem:[#allocation1] ss:$9 sm:$0xff] %v1746
        %s2003 = scalar_lea.vmem [#allocation1], 1
        %2004 = vst [vmem:[%s2003] ss:$9 sm:$0xff] %v1747
        %s2005 = scalar_lea.vmem [#allocation1], 2
        %2006 = vst [vmem:[%s2005] ss:$9 sm:$0xff] %v1748
        %s2007 = scalar_lea.vmem [#allocation1], 3
        %2008 = vst [vmem:[%s2007] ss:$9 sm:$0xff] %v1749
        %s2009 = scalar_lea.vmem [#allocation1], 4
        %2010 = vst [vmem:[%s2009] ss:$9 sm:$0xff] %v1750
        %s2011 = scalar_lea.vmem [#allocation1], 5
        %2012 = vst [vmem:[%s2011] ss:$9 sm:$0xff] %v1751
        %s2013 = scalar_lea.vmem [#allocation1], 6
        %2014 = vst [vmem:[%s2013] ss:$9 sm:$0xff] %v1752
        %s2015 = scalar_lea.vmem [#allocation1], 7
        %2016 = vst [vmem:[%s2015] ss:$9 sm:$0xff] %v1753
        %v2017 = vld [vmem:[#allocation1] sm:$0xff]
        %2018 = vst [vmem:[#allocation1] ss:$9 sm:$0xff] %v1754
        %2019 = vst [vmem:[%s2003] ss:$9 sm:$0xff] %v1755
        %2020 = vst [vmem:[%s2005] ss:$9 sm:$0xff] %v1756
        %2021 = vst [vmem:[%s2007] ss:$9 sm:$0xff] %v1757
        %2022 = vst [vmem:[%s2009] ss:$9 sm:$0xff] %v1758
        %2023 = vst [vmem:[%s2011] ss:$9 sm:$0xff] %v1759
        %2024 = vst [vmem:[%s2013] ss:$9 sm:$0xff] %v1760
        %2025 = vst [vmem:[%s2015] ss:$9 sm:$0xff] %v1761
        %v2026 = vld [vmem:[#allocation1] sm:$0xff]
        %2027 = vst [vmem:[#allocation1] ss:$9 sm:$0xff] %v1762
        %2028 = vst [vmem:[%s2003] ss:$9 sm:$0xff] %v1763
        %2029 = vst [vmem:[%s2005] ss:$9 sm:$0xff] %v1764
        %2030 = vst [vmem:[%s2007] ss:$9 sm:$0xff] %v1765
        %2031 = vst [vmem:[%s2009] ss:$9 sm:$0xff] %v1766
        %2032 = vst [vmem:[%s2011] ss:$9 sm:$0xff] %v1767
        %2033 = vst [vmem:[%s2013] ss:$9 sm:$0xff] %v1768
        %2034 = vst [vmem:[%s2015] ss:$9 sm:$0xff] %v1769
        %v2035 = vld [vmem:[#allocation1] sm:$0xff]
        %2036 = vst [vmem:[#allocation1] ss:$9 sm:$0xff] %v1770
        %2037 = vst [vmem:[%s2003] ss:$9 sm:$0xff] %v1771
        %2038 = vst [vmem:[%s2005] ss:$9 sm:$0xff] %v1772
        %2039 = vst [vmem:[%s2007] ss:$9 sm:$0xff] %v1773
        %2040 = vst [vmem:[%s2009] ss:$9 sm:$0xff] %v1774
        %2041 = vst [vmem:[%s2011] ss:$9 sm:$0xff] %v1775
        %2042 = vst [vmem:[%s2013] ss:$9 sm:$0xff] %v1776
        %2043 = vst [vmem:[%s2015] ss:$9 sm:$0xff] %v1777
        %v2044 = vld [vmem:[#allocation1] sm:$0xff]
        %2045 = vst [vmem:[#allocation1] ss:$9 sm:$0xff] %v1778
        %2046 = vst [vmem:[%s2003] ss:$9 sm:$0xff] %v1779
        %2047 = vst [vmem:[%s2005] ss:$9 sm:$0xff] %v1780
        %2048 = vst [vmem:[%s2007] ss:$9 sm:$0xff] %v1781
        %2049 = vst [vmem:[%s2009] ss:$9 sm:$0xff] %v1782
        %2050 = vst [vmem:[%s2011] ss:$9 sm:$0xff] %v1783
        %2051 = vst [vmem:[%s2013] ss:$9 sm:$0xff] %v1784
        %2052 = vst [vmem:[%s2015] ss:$9 sm:$0xff] %v1785
        %v2053 = vld [vmem:[#allocation1] sm:$0xff]
        %2054 = vst [vmem:[#allocation1] ss:$9 sm:$0xff] %v1786
        %2055 = vst [vmem:[%s2003] ss:$9 sm:$0xff] %v1787
        %2056 = vst [vmem:[%s2005] ss:$9 sm:$0xff] %v1788
        %2057 = vst [vmem:[%s2007] ss:$9 sm:$0xff] %v1789
        %2058 = vst [vmem:[%s2009] ss:$9 sm:$0xff] %v1790
        %2059 = vst [vmem:[%s2011] ss:$9 sm:$0xff] %v1791
        %2060 = vst [vmem:[%s2013] ss:$9 sm:$0xff] %v1792
        %2061 = vst [vmem:[%s2015] ss:$9 sm:$0xff] %v1793
        %v2062 = vld [vmem:[#allocation1] sm:$0xff]
        %2063 = vst [vmem:[#allocation1] ss:$9 sm:$0xff] %v1794
        %2064 = vst [vmem:[%s2003] ss:$9 sm:$0xff] %v1795
        %2065 = vst [vmem:[%s2005] ss:$9 sm:$0xff] %v1796
        %2066 = vst [vmem:[%s2007] ss:$9 sm:$0xff] %v1797
        %2067 = vst [vmem:[%s2009] ss:$9 sm:$0xff] %v1798
        %2068 = vst [vmem:[%s2011] ss:$9 sm:$0xff] %v1799
        %2069 = vst [vmem:[%s2013] ss:$9 sm:$0xff] %v1800
        %2070 = vst [vmem:[%s2015] ss:$9 sm:$0xff] %v1801
        %v2071 = vld [vmem:[#allocation1] sm:$0xff]
        %2072 = vst [vmem:[#allocation1] ss:$9 sm:$0xff] %v1802
        %2073 = vst [vmem:[%s2003] ss:$9 sm:$0xff] %v1803
        %2074 = vst [vmem:[%s2005] ss:$9 sm:$0xff] %v1804
        %2075 = vst [vmem:[%s2007] ss:$9 sm:$0xff] %v1805
        %2076 = vst [vmem:[%s2009] ss:$9 sm:$0xff] %v1806
        %2077 = vst [vmem:[%s2011] ss:$9 sm:$0xff] %v1807
        %2078 = vst [vmem:[%s2013] ss:$9 sm:$0xff] %v1808
        %2079 = vst [vmem:[%s2015] ss:$9 sm:$0xff] %v1809
        %v2080 = vld [vmem:[#allocation1] sm:$0xff]
        %2081 = vst [vmem:[#allocation1] ss:$9 sm:$0xff] %v1810
        %2082 = vst [vmem:[%s2003] ss:$9 sm:$0xff] %v1811
        %2083 = vst [vmem:[%s2005] ss:$9 sm:$0xff] %v1812
        %2084 = vst [vmem:[%s2007] ss:$9 sm:$0xff] %v1813
        %2085 = vst [vmem:[%s2009] ss:$9 sm:$0xff] %v1814
        %2086 = vst [vmem:[%s2011] ss:$9 sm:$0xff] %v1815
        %2087 = vst [vmem:[%s2013] ss:$9 sm:$0xff] %v1816
        %2088 = vst [vmem:[%s2015] ss:$9 sm:$0xff] %v1817
        %v2089 = vld [vmem:[#allocation1] sm:$0xff]
        %2090 = vst [vmem:[#allocation1] ss:$9 sm:$0xff] %v1818
        %2091 = vst [vmem:[%s2003] ss:$9 sm:$0xff] %v1819
        %2092 = vst [vmem:[%s2005] ss:$9 sm:$0xff] %v1820
        %2093 = vst [vmem:[%s2007] ss:$9 sm:$0xff] %v1821
        %2094 = vst [vmem:[%s2009] ss:$9 sm:$0xff] %v1822
        %2095 = vst [vmem:[%s2011] ss:$9 sm:$0xff] %v1823
        %2096 = vst [vmem:[%s2013] ss:$9 sm:$0xff] %v1824
        %2097 = vst [vmem:[%s2015] ss:$9 sm:$0xff] %v1825
        %v2098 = vld [vmem:[#allocation1] sm:$0xff]
        %2099 = vst [vmem:[#allocation1] ss:$9 sm:$0xff] %v1826
        %2100 = vst [vmem:[%s2003] ss:$9 sm:$0xff] %v1827
        %2101 = vst [vmem:[%s2005] ss:$9 sm:$0xff] %v1828
        %2102 = vst [vmem:[%s2007] ss:$9 sm:$0xff] %v1829
        %2103 = vst [vmem:[%s2009] ss:$9 sm:$0xff] %v1830
        %2104 = vst [vmem:[%s2011] ss:$9 sm:$0xff] %v1831
        %2105 = vst [vmem:[%s2013] ss:$9 sm:$0xff] %v1832
        %2106 = vst [vmem:[%s2015] ss:$9 sm:$0xff] %v1833
        %v2107 = vld [vmem:[#allocation1] sm:$0xff]
        %2108 = vst [vmem:[#allocation1] ss:$9 sm:$0xff] %v1834
        %2109 = vst [vmem:[%s2003] ss:$9 sm:$0xff] %v1835
        %2110 = vst [vmem:[%s2005] ss:$9 sm:$0xff] %v1836
        %2111 = vst [vmem:[%s2007] ss:$9 sm:$0xff] %v1837
        %2112 = vst [vmem:[%s2009] ss:$9 sm:$0xff] %v1838
        %2113 = vst [vmem:[%s2011] ss:$9 sm:$0xff] %v1839
        %2114 = vst [vmem:[%s2013] ss:$9 sm:$0xff] %v1840
        %2115 = vst [vmem:[%s2015] ss:$9 sm:$0xff] %v1841
        %v2116 = vld [vmem:[#allocation1] sm:$0xff]
        %2117 = vst [vmem:[#allocation1] ss:$9 sm:$0xff] %v1842
        %2118 = vst [vmem:[%s2003] ss:$9 sm:$0xff] %v1843
        %2119 = vst [vmem:[%s2005] ss:$9 sm:$0xff] %v1844
        %2120 = vst [vmem:[%s2007] ss:$9 sm:$0xff] %v1845
        %2121 = vst [vmem:[%s2009] ss:$9 sm:$0xff] %v1846
        %2122 = vst [vmem:[%s2011] ss:$9 sm:$0xff] %v1847
        %2123 = vst [vmem:[%s2013] ss:$9 sm:$0xff] %v1848
        %2124 = vst [vmem:[%s2015] ss:$9 sm:$0xff] %v1849
        %v2125 = vld [vmem:[#allocation1] sm:$0xff]
        %2126 = vst [vmem:[#allocation1] ss:$9 sm:$0xff] %v1850
        %2127 = vst [vmem:[%s2003] ss:$9 sm:$0xff] %v1851
        %2128 = vst [vmem:[%s2005] ss:$9 sm:$0xff] %v1852
        %2129 = vst [vmem:[%s2007] ss:$9 sm:$0xff] %v1853
        %2130 = vst [vmem:[%s2009] ss:$9 sm:$0xff] %v1854
        %2131 = vst [vmem:[%s2011] ss:$9 sm:$0xff] %v1855
        %2132 = vst [vmem:[%s2013] ss:$9 sm:$0xff] %v1856
        %2133 = vst [vmem:[%s2015] ss:$9 sm:$0xff] %v1857
        %v2134 = vld [vmem:[#allocation1] sm:$0xff]
        %2135 = vst [vmem:[#allocation1] ss:$9 sm:$0xff] %v1858
        %2136 = vst [vmem:[%s2003] ss:$9 sm:$0xff] %v1859
        %2137 = vst [vmem:[%s2005] ss:$9 sm:$0xff] %v1860
        %2138 = vst [vmem:[%s2007] ss:$9 sm:$0xff] %v1861
        %2139 = vst [vmem:[%s2009] ss:$9 sm:$0xff] %v1862
        %2140 = vst [vmem:[%s2011] ss:$9 sm:$0xff] %v1863
        %2141 = vst [vmem:[%s2013] ss:$9 sm:$0xff] %v1864
        %2142 = vst [vmem:[%s2015] ss:$9 sm:$0xff] %v1865
        %v2143 = vld [vmem:[#allocation1] sm:$0xff]
        %2144 = vst [vmem:[#allocation1] ss:$9 sm:$0xff] %v1866
        %2145 = vst [vmem:[%s2003] ss:$9 sm:$0xff] %v1867
        %2146 = vst [vmem:[%s2005] ss:$9 sm:$0xff] %v1868
        %2147 = vst [vmem:[%s2007] ss:$9 sm:$0xff] %v1869
        %2148 = vst [vmem:[%s2009] ss:$9 sm:$0xff] %v1870
        %2149 = vst [vmem:[%s2011] ss:$9 sm:$0xff] %v1871
        %2150 = vst [vmem:[%s2013] ss:$9 sm:$0xff] %v1872
        %2151 = vst [vmem:[%s2015] ss:$9 sm:$0xff] %v1873
        %v2152 = vld [vmem:[#allocation1] sm:$0xff]
        %2153 = vst [vmem:[#allocation1] ss:$9 sm:$0xff] %v1874
        %2154 = vst [vmem:[%s2003] ss:$9 sm:$0xff] %v1875
        %2155 = vst [vmem:[%s2005] ss:$9 sm:$0xff] %v1876
        %2156 = vst [vmem:[%s2007] ss:$9 sm:$0xff] %v1877
        %2157 = vst [vmem:[%s2009] ss:$9 sm:$0xff] %v1878
        %2158 = vst [vmem:[%s2011] ss:$9 sm:$0xff] %v1879
        %2159 = vst [vmem:[%s2013] ss:$9 sm:$0xff] %v1880
        %2160 = vst [vmem:[%s2015] ss:$9 sm:$0xff] %v1881
        %v2161 = vld [vmem:[#allocation1] sm:$0xff]
        %2162 = vst [vmem:[#allocation1] ss:$9 sm:$0xff] %v1882
        %2163 = vst [vmem:[%s2003] ss:$9 sm:$0xff] %v1883
        %2164 = vst [vmem:[%s2005] ss:$9 sm:$0xff] %v1884
        %2165 = vst [vmem:[%s2007] ss:$9 sm:$0xff] %v1885
        %2166 = vst [vmem:[%s2009] ss:$9 sm:$0xff] %v1886
        %2167 = vst [vmem:[%s2011] ss:$9 sm:$0xff] %v1887
        %2168 = vst [vmem:[%s2013] ss:$9 sm:$0xff] %v1888
        %2169 = vst [vmem:[%s2015] ss:$9 sm:$0xff] %v1889
        %v2170 = vld [vmem:[#allocation1] sm:$0xff]
        %2171 = vst [vmem:[#allocation1] ss:$9 sm:$0xff] %v1890
        %2172 = vst [vmem:[%s2003] ss:$9 sm:$0xff] %v1891
        %2173 = vst [vmem:[%s2005] ss:$9 sm:$0xff] %v1892
        %2174 = vst [vmem:[%s2007] ss:$9 sm:$0xff] %v1893
        %2175 = vst [vmem:[%s2009] ss:$9 sm:$0xff] %v1894
        %2176 = vst [vmem:[%s2011] ss:$9 sm:$0xff] %v1895
        %2177 = vst [vmem:[%s2013] ss:$9 sm:$0xff] %v1896
        %2178 = vst [vmem:[%s2015] ss:$9 sm:$0xff] %v1897
        %v2179 = vld [vmem:[#allocation1] sm:$0xff]
        %2180 = vst [vmem:[#allocation1] ss:$9 sm:$0xff] %v1898
        %2181 = vst [vmem:[%s2003] ss:$9 sm:$0xff] %v1899
        %2182 = vst [vmem:[%s2005] ss:$9 sm:$0xff] %v1900
        %2183 = vst [vmem:[%s2007] ss:$9 sm:$0xff] %v1901
        %2184 = vst [vmem:[%s2009] ss:$9 sm:$0xff] %v1902
        %2185 = vst [vmem:[%s2011] ss:$9 sm:$0xff] %v1903
        %2186 = vst [vmem:[%s2013] ss:$9 sm:$0xff] %v1904
        %2187 = vst [vmem:[%s2015] ss:$9 sm:$0xff] %v1905
        %v2188 = vld [vmem:[#allocation1] sm:$0xff]
        %2189 = vst [vmem:[#allocation1] ss:$9 sm:$0xff] %v1906
        %2190 = vst [vmem:[%s2003] ss:$9 sm:$0xff] %v1907
        %2191 = vst [vmem:[%s2005] ss:$9 sm:$0xff] %v1908
        %2192 = vst [vmem:[%s2007] ss:$9 sm:$0xff] %v1909
        %2193 = vst [vmem:[%s2009] ss:$9 sm:$0xff] %v1910
        %2194 = vst [vmem:[%s2011] ss:$9 sm:$0xff] %v1911
        %2195 = vst [vmem:[%s2013] ss:$9 sm:$0xff] %v1912
        %2196 = vst [vmem:[%s2015] ss:$9 sm:$0xff] %v1913
        %v2197 = vld [vmem:[#allocation1] sm:$0xff]
        %2198 = vst [vmem:[#allocation1] ss:$9 sm:$0xff] %v1914
        %2199 = vst [vmem:[%s2003] ss:$9 sm:$0xff] %v1915
        %2200 = vst [vmem:[%s2005] ss:$9 sm:$0xff] %v1916
        %2201 = vst [vmem:[%s2007] ss:$9 sm:$0xff] %v1917
        %2202 = vst [vmem:[%s2009] ss:$9 sm:$0xff] %v1918
        %2203 = vst [vmem:[%s2011] ss:$9 sm:$0xff] %v1919
        %2204 = vst [vmem:[%s2013] ss:$9 sm:$0xff] %v1920
        %2205 = vst [vmem:[%s2015] ss:$9 sm:$0xff] %v1921
        %v2206 = vld [vmem:[#allocation1] sm:$0xff]
        %2207 = vst [vmem:[#allocation1] ss:$9 sm:$0xff] %v1922
        %2208 = vst [vmem:[%s2003] ss:$9 sm:$0xff] %v1923
        %2209 = vst [vmem:[%s2005] ss:$9 sm:$0xff] %v1924
        %2210 = vst [vmem:[%s2007] ss:$9 sm:$0xff] %v1925
        %2211 = vst [vmem:[%s2009] ss:$9 sm:$0xff] %v1926
        %2212 = vst [vmem:[%s2011] ss:$9 sm:$0xff] %v1927
        %2213 = vst [vmem:[%s2013] ss:$9 sm:$0xff] %v1928
        %2214 = vst [vmem:[%s2015] ss:$9 sm:$0xff] %v1929
        %v2215 = vld [vmem:[#allocation1] sm:$0xff]
        %2216 = vst [vmem:[#allocation1] ss:$9 sm:$0xff] %v1930
        %2217 = vst [vmem:[%s2003] ss:$9 sm:$0xff] %v1931
        %2218 = vst [vmem:[%s2005] ss:$9 sm:$0xff] %v1932
        %2219 = vst [vmem:[%s2007] ss:$9 sm:$0xff] %v1933
        %2220 = vst [vmem:[%s2009] ss:$9 sm:$0xff] %v1934
        %2221 = vst [vmem:[%s2011] ss:$9 sm:$0xff] %v1935
        %2222 = vst [vmem:[%s2013] ss:$9 sm:$0xff] %v1936
        %2223 = vst [vmem:[%s2015] ss:$9 sm:$0xff] %v1937
        %v2224 = vld [vmem:[#allocation1] sm:$0xff]
        %2225 = vst [vmem:[#allocation1] ss:$9 sm:$0xff] %v1938
        %2226 = vst [vmem:[%s2003] ss:$9 sm:$0xff] %v1939
        %2227 = vst [vmem:[%s2005] ss:$9 sm:$0xff] %v1940
        %2228 = vst [vmem:[%s2007] ss:$9 sm:$0xff] %v1941
        %2229 = vst [vmem:[%s2009] ss:$9 sm:$0xff] %v1942
        %2230 = vst [vmem:[%s2011] ss:$9 sm:$0xff] %v1943
        %2231 = vst [vmem:[%s2013] ss:$9 sm:$0xff] %v1944
        %2232 = vst [vmem:[%s2015] ss:$9 sm:$0xff] %v1945
        %v2233 = vld [vmem:[#allocation1] sm:$0xff]
        %2234 = vst [vmem:[#allocation1] ss:$9 sm:$0xff] %v1946
        %2235 = vst [vmem:[%s2003] ss:$9 sm:$0xff] %v1947
        %2236 = vst [vmem:[%s2005] ss:$9 sm:$0xff] %v1948
        %2237 = vst [vmem:[%s2007] ss:$9 sm:$0xff] %v1949
        %2238 = vst [vmem:[%s2009] ss:$9 sm:$0xff] %v1950
        %2239 = vst [vmem:[%s2011] ss:$9 sm:$0xff] %v1951
        %2240 = vst [vmem:[%s2013] ss:$9 sm:$0xff] %v1952
        %2241 = vst [vmem:[%s2015] ss:$9 sm:$0xff] %v1953
        %v2242 = vld [vmem:[#allocation1] sm:$0xff]
        %2243 = vst [vmem:[#allocation1] ss:$9 sm:$0xff] %v1954
        %2244 = vst [vmem:[%s2003] ss:$9 sm:$0xff] %v1955
        %2245 = vst [vmem:[%s2005] ss:$9 sm:$0xff] %v1956
        %2246 = vst [vmem:[%s2007] ss:$9 sm:$0xff] %v1957
        %2247 = vst [vmem:[%s2009] ss:$9 sm:$0xff] %v1958
        %2248 = vst [vmem:[%s2011] ss:$9 sm:$0xff] %v1959
        %2249 = vst [vmem:[%s2013] ss:$9 sm:$0xff] %v1960
        %2250 = vst [vmem:[%s2015] ss:$9 sm:$0xff] %v1961
        %v2251 = vld [vmem:[#allocation1] sm:$0xff]
        %2252 = vst [vmem:[#allocation1] ss:$9 sm:$0xff] %v1962
        %2253 = vst [vmem:[%s2003] ss:$9 sm:$0xff] %v1963
        %2254 = vst [vmem:[%s2005] ss:$9 sm:$0xff] %v1964
        %2255 = vst [vmem:[%s2007] ss:$9 sm:$0xff] %v1965
        %2256 = vst [vmem:[%s2009] ss:$9 sm:$0xff] %v1966
        %2257 = vst [vmem:[%s2011] ss:$9 sm:$0xff] %v1967
        %2258 = vst [vmem:[%s2013] ss:$9 sm:$0xff] %v1968
        %2259 = vst [vmem:[%s2015] ss:$9 sm:$0xff] %v1969
        %v2260 = vld [vmem:[#allocation1] sm:$0xff]
        %2261 = vst [vmem:[#allocation1] ss:$9 sm:$0xff] %v1970
        %2262 = vst [vmem:[%s2003] ss:$9 sm:$0xff] %v1971
        %2263 = vst [vmem:[%s2005] ss:$9 sm:$0xff] %v1972
        %2264 = vst [vmem:[%s2007] ss:$9 sm:$0xff] %v1973
        %2265 = vst [vmem:[%s2009] ss:$9 sm:$0xff] %v1974
        %2266 = vst [vmem:[%s2011] ss:$9 sm:$0xff] %v1975
        %2267 = vst [vmem:[%s2013] ss:$9 sm:$0xff] %v1976
        %2268 = vst [vmem:[%s2015] ss:$9 sm:$0xff] %v1977
        %v2269 = vld [vmem:[#allocation1] sm:$0xff]
        %2270 = vst [vmem:[#allocation1] ss:$9 sm:$0xff] %v1978
        %2271 = vst [vmem:[%s2003] ss:$9 sm:$0xff] %v1979
        %2272 = vst [vmem:[%s2005] ss:$9 sm:$0xff] %v1980
        %2273 = vst [vmem:[%s2007] ss:$9 sm:$0xff] %v1981
        %2274 = vst [vmem:[%s2009] ss:$9 sm:$0xff] %v1982
        %2275 = vst [vmem:[%s2011] ss:$9 sm:$0xff] %v1983
        %2276 = vst [vmem:[%s2013] ss:$9 sm:$0xff] %v1984
        %2277 = vst [vmem:[%s2015] ss:$9 sm:$0xff] %v1985
        %v2278 = vld [vmem:[#allocation1] sm:$0xff]
        %2279 = vst [vmem:[#allocation1] ss:$9 sm:$0xff] %v1986
        %2280 = vst [vmem:[%s2003] ss:$9 sm:$0xff] %v1987
        %2281 = vst [vmem:[%s2005] ss:$9 sm:$0xff] %v1988
        %2282 = vst [vmem:[%s2007] ss:$9 sm:$0xff] %v1989
        %2283 = vst [vmem:[%s2009] ss:$9 sm:$0xff] %v1990
        %2284 = vst [vmem:[%s2011] ss:$9 sm:$0xff] %v1991
        %2285 = vst [vmem:[%s2013] ss:$9 sm:$0xff] %v1992
        %2286 = vst [vmem:[%s2015] ss:$9 sm:$0xff] %v1993
        %v2287 = vld [vmem:[#allocation1] sm:$0xff]
        %2288 = vst [vmem:[#allocation1] ss:$9 sm:$0xff] %v1994
        %2289 = vst [vmem:[%s2003] ss:$9 sm:$0xff] %v1995
        %2290 = vst [vmem:[%s2005] ss:$9 sm:$0xff] %v1996
        %2291 = vst [vmem:[%s2007] ss:$9 sm:$0xff] %v1997
        %2292 = vst [vmem:[%s2009] ss:$9 sm:$0xff] %v1998
        %2293 = vst [vmem:[%s2011] ss:$9 sm:$0xff] %v1999
        %2294 = vst [vmem:[%s2013] ss:$9 sm:$0xff] %v2000
        %2295 = vst [vmem:[%s2015] ss:$9 sm:$0xff] %v2001
        %v2296 = vld [vmem:[#allocation1] sm:$0xff]
        %2297 = vset.pattern.permute.xlu0 0
        %2298 = vperm.xlu0 %2297, %v2017
        %v2299 = vpop.permute.xlu0 %2298
        %2300 = vset.pattern.permute.xlu0 0
        %2301 = vperm.xlu0 %2300, %v2026
        %v2302 = vpop.permute.xlu0 %2301
        %2303 = vset.pattern.permute.xlu0 0
        %2304 = vperm.xlu0 %2303, %v2035
        %v2305 = vpop.permute.xlu0 %2304
        %2306 = vset.pattern.permute.xlu0 0
        %2307 = vperm.xlu0 %2306, %v2044
        %v2308 = vpop.permute.xlu0 %2307
        %2309 = vset.pattern.permute.xlu0 0
        %2310 = vperm.xlu0 %2309, %v2053
        %v2311 = vpop.permute.xlu0 %2310
        %2312 = vset.pattern.permute.xlu0 0
        %2313 = vperm.xlu0 %2312, %v2062
        %v2314 = vpop.permute.xlu0 %2313
        %2315 = vset.pattern.permute.xlu0 0
        %2316 = vperm.xlu0 %2315, %v2071
        %v2317 = vpop.permute.xlu0 %2316
        %2318 = vset.pattern.permute.xlu0 0
        %2319 = vperm.xlu0 %2318, %v2080
        %v2320 = vpop.permute.xlu0 %2319
        %2321 = vset.pattern.permute.xlu0 0
        %2322 = vperm.xlu0 %2321, %v2089
        %v2323 = vpop.permute.xlu0 %2322
        %2324 = vset.pattern.permute.xlu0 0
        %2325 = vperm.xlu0 %2324, %v2098
        %v2326 = vpop.permute.xlu0 %2325
        %2327 = vset.pattern.permute.xlu0 0
        %2328 = vperm.xlu0 %2327, %v2107
        %v2329 = vpop.permute.xlu0 %2328
        %2330 = vset.pattern.permute.xlu0 0
        %2331 = vperm.xlu0 %2330, %v2116
        %v2332 = vpop.permute.xlu0 %2331
        %2333 = vset.pattern.permute.xlu0 0
        %2334 = vperm.xlu0 %2333, %v2125
        %v2335 = vpop.permute.xlu0 %2334
        %2336 = vset.pattern.permute.xlu0 0
        %2337 = vperm.xlu0 %2336, %v2134
        %v2338 = vpop.permute.xlu0 %2337
        %2339 = vset.pattern.permute.xlu0 0
        %2340 = vperm.xlu0 %2339, %v2143
        %v2341 = vpop.permute.xlu0 %2340
        %2342 = vset.pattern.permute.xlu0 0
        %2343 = vperm.xlu0 %2342, %v2152
        %v2344 = vpop.permute.xlu0 %2343
        %2345 = vset.pattern.permute.xlu0 0
        %2346 = vperm.xlu0 %2345, %v2161
        %v2347 = vpop.permute.xlu0 %2346
        %2348 = vset.pattern.permute.xlu0 0
        %2349 = vperm.xlu0 %2348, %v2170
        %v2350 = vpop.permute.xlu0 %2349
        %2351 = vset.pattern.permute.xlu0 0
        %2352 = vperm.xlu0 %2351, %v2179
        %v2353 = vpop.permute.xlu0 %2352
        %2354 = vset.pattern.permute.xlu0 0
        %2355 = vperm.xlu0 %2354, %v2188
        %v2356 = vpop.permute.xlu0 %2355
        %2357 = vset.pattern.permute.xlu0 0
        %2358 = vperm.xlu0 %2357, %v2197
        %v2359 = vpop.permute.xlu0 %2358
        %2360 = vset.pattern.permute.xlu0 0
        %2361 = vperm.xlu0 %2360, %v2206
        %v2362 = vpop.permute.xlu0 %2361
        %2363 = vset.pattern.permute.xlu0 0
        %2364 = vperm.xlu0 %2363, %v2215
        %v2365 = vpop.permute.xlu0 %2364
        %2366 = vset.pattern.permute.xlu0 0
        %2367 = vperm.xlu0 %2366, %v2224
        %v2368 = vpop.permute.xlu0 %2367
        %2369 = vset.pattern.permute.xlu0 0
        %2370 = vperm.xlu0 %2369, %v2233
        %v2371 = vpop.permute.xlu0 %2370
        %2372 = vset.pattern.permute.xlu0 0
        %2373 = vperm.xlu0 %2372, %v2242
        %v2374 = vpop.permute.xlu0 %2373
        %2375 = vset.pattern.permute.xlu0 0
        %2376 = vperm.xlu0 %2375, %v2251
        %v2377 = vpop.permute.xlu0 %2376
        %2378 = vset.pattern.permute.xlu0 0
        %2379 = vperm.xlu0 %2378, %v2260
        %v2380 = vpop.permute.xlu0 %2379
        %2381 = vset.pattern.permute.xlu0 0
        %2382 = vperm.xlu0 %2381, %v2269
        %v2383 = vpop.permute.xlu0 %2382
        %2384 = vset.pattern.permute.xlu0 0
        %2385 = vperm.xlu0 %2384, %v2278
        %v2386 = vpop.permute.xlu0 %2385
        %2387 = vset.pattern.permute.xlu0 0
        %2388 = vperm.xlu0 %2387, %v2287
        %v2389 = vpop.permute.xlu0 %2388
        %2390 = vset.pattern.permute.xlu0 0
        %2391 = vperm.xlu0 %2390, %v2296
        %v2392 = vpop.permute.xlu0 %2391
        %v2393 = vperm.slane %v2299, %v1517
        %v2394 = vperm.slane %v2302, %v1519
        %v2395 = vsel %vm1521, %v2394, %v2393
        %v2396 = vperm.slane %v2305, %v1523
        %v2397 = vsel %vm1525, %v2396, %v2395
        %v2398 = vperm.slane %v2308, %v1527
        %v2399 = vsel %vm1529, %v2398, %v2397
        %v2400 = vperm.slane %v2311, %v1531
        %v2401 = vsel %vm1533, %v2400, %v2399
        %v2402 = vperm.slane %v2314, %v1535
        %v2403 = vsel %vm1537, %v2402, %v2401
        %v2404 = vperm.slane %v2317, %v1539
        %v2405 = vsel %vm1541, %v2404, %v2403
        %v2406 = vperm.slane %v2320, %v1543
        %v2407 = vsel %vm1545, %v2406, %v2405
        %v2408 = vperm.slane %v2323, %v1547
        %v2409 = vsel %vm1549, %v2408, %v2407
        %v2410 = vperm.slane %v2326, %v1551
        %v2411 = vsel %vm1553, %v2410, %v2409
        %v2412 = vperm.slane %v2329, %v1555
        %v2413 = vsel %vm1557, %v2412, %v2411
        %v2414 = vperm.slane %v2332, %v1559
        %v2415 = vsel %vm1561, %v2414, %v2413
        %v2416 = vperm.slane %v2335, %v1563
        %v2417 = vsel %vm1565, %v2416, %v2415
        %v2418 = vperm.slane %v2338, %v1567
        %v2419 = vsel %vm1569, %v2418, %v2417
        %v2420 = vperm.slane %v2341, %v1571
        %v2421 = vsel %vm1573, %v2420, %v2419
        %v2422 = vperm.slane %v2344, %v1575
        %v2423 = vsel %vm1577, %v2422, %v2421
        %v2424 = vperm.slane %v2347, %v1517
        %v2425 = vperm.slane %v2350, %v1519
        %v2426 = vsel %vm1521, %v2425, %v2424
        %v2427 = vperm.slane %v2353, %v1523
        %v2428 = vsel %vm1525, %v2427, %v2426
        %v2429 = vperm.slane %v2356, %v1527
        %v2430 = vsel %vm1529, %v2429, %v2428
        %v2431 = vperm.slane %v2359, %v1531
        %v2432 = vsel %vm1533, %v2431, %v2430
        %v2433 = vperm.slane %v2362, %v1535
        %v2434 = vsel %vm1537, %v2433, %v2432
        %v2435 = vperm.slane %v2365, %v1539
        %v2436 = vsel %vm1541, %v2435, %v2434
        %v2437 = vperm.slane %v2368, %v1543
        %v2438 = vsel %vm1545, %v2437, %v2436
        %v2439 = vperm.slane %v2371, %v1547
        %v2440 = vsel %vm1549, %v2439, %v2438
        %v2441 = vperm.slane %v2374, %v1551
        %v2442 = vsel %vm1553, %v2441, %v2440
        %v2443 = vperm.slane %v2377, %v1555
        %v2444 = vsel %vm1557, %v2443, %v2442
        %v2445 = vperm.slane %v2380, %v1559
        %v2446 = vsel %vm1561, %v2445, %v2444
        %v2447 = vperm.slane %v2383, %v1563
        %v2448 = vsel %vm1565, %v2447, %v2446
        %v2449 = vperm.slane %v2386, %v1567
        %v2450 = vsel %vm1569, %v2449, %v2448
        %v2451 = vperm.slane %v2389, %v1571
        %v2452 = vsel %vm1573, %v2451, %v2450
        %v2453 = vperm.slane %v2392, %v1575
        %v2454 = vsel %vm1577, %v2453, %v2452
        %v2455 = vrot.slane %v2454, 7
        %v2456 = vsel %vm1611, %v2423, %v2455
        %2458 = vst.msk [vmem:[%s268] sm:$0x3] %vm1616, %v2456
        %vm2459 = vcmp.eq.s32.totalorder %v1517, %v775
        %vm2460 = vcmp.eq.s32.totalorder %v1517, %v778
        %vm2461 = vcmp.eq.s32.totalorder %v1517, %v781
        %vm2462 = vcmp.eq.s32.totalorder %v1517, %v784
        %vm2463 = vcmp.eq.s32.totalorder %v1517, %v787
        %vm2464 = vcmp.eq.s32.totalorder %v1517, %v790
        %vm2465 = vcmp.eq.s32.totalorder %v1517, %v793
        %vm2466 = vcmp.eq.s32.totalorder %v1517, %v796
        %vm2467 = vcmp.eq.s32.totalorder %v1517, %v799
        %vm2468 = vcmp.eq.s32.totalorder %v1517, %v802
        %vm2469 = vcmp.eq.s32.totalorder %v1517, %v805
        %vm2470 = vcmp.eq.s32.totalorder %v1517, %v808
        %vm2471 = vcmp.eq.s32.totalorder %v1517, %v811
        %vm2472 = vcmp.eq.s32.totalorder %v1517, %v814
        %vm2473 = vcmp.eq.s32.totalorder %v1517, %v817
        %vm2474 = vcmp.eq.s32.totalorder %v1517, %v820
        %vm2475 = vcmp.eq.s32.totalorder %v1517, %v823
        %vm2476 = vcmp.eq.s32.totalorder %v1517, %v826
        %vm2477 = vcmp.eq.s32.totalorder %v1517, %v829
        %vm2478 = vcmp.eq.s32.totalorder %v1517, %v832
        %vm2479 = vcmp.eq.s32.totalorder %v1517, %v835
        %vm2480 = vcmp.eq.s32.totalorder %v1517, %v838
        %vm2481 = vcmp.eq.s32.totalorder %v1517, %v841
        %vm2482 = vcmp.eq.s32.totalorder %v1517, %v844
        %vm2483 = vcmp.eq.s32.totalorder %v1517, %v847
        %vm2484 = vcmp.eq.s32.totalorder %v1517, %v850
        %vm2485 = vcmp.eq.s32.totalorder %v1517, %v853
        %vm2486 = vcmp.eq.s32.totalorder %v1517, %v856
        %vm2487 = vcmp.eq.s32.totalorder %v1517, %v859
        %vm2488 = vcmp.eq.s32.totalorder %v1517, %v862
        %vm2489 = vcmp.eq.s32.totalorder %v1517, %v865
        %vm2490 = vcmp.eq.s32.totalorder %v1517, %v868
        %v2491 = vsel %vm2459, 1, 0
        %v2492 = vsel %vm2460, 1, 0
        %v2493 = vsel %vm2461, 1, 0
        %v2494 = vsel %vm2462, 1, 0
        %v2495 = vsel %vm2463, 1, 0
        %v2496 = vsel %vm2464, 1, 0
        %v2497 = vsel %vm2465, 1, 0
        %v2498 = vsel %vm2466, 1, 0
        %v2499 = vsel %vm2467, 1, 0
        %v2500 = vsel %vm2468, 1, 0
        %v2501 = vsel %vm2469, 1, 0
        %v2502 = vsel %vm2470, 1, 0
        %v2503 = vsel %vm2471, 1, 0
        %v2504 = vsel %vm2472, 1, 0
        %v2505 = vsel %vm2473, 1, 0
        %v2506 = vsel %vm2474, 1, 0
        %v2507 = vsel %vm2475, 1, 0
        %v2508 = vsel %vm2476, 1, 0
        %v2509 = vsel %vm2477, 1, 0
        %v2510 = vsel %vm2478, 1, 0
        %v2511 = vsel %vm2479, 1, 0
        %v2512 = vsel %vm2480, 1, 0
        %v2513 = vsel %vm2481, 1, 0
        %v2514 = vsel %vm2482, 1, 0
        %v2515 = vsel %vm2483, 1, 0
        %v2516 = vsel %vm2484, 1, 0
        %v2517 = vsel %vm2485, 1, 0
        %v2518 = vsel %vm2486, 1, 0
        %v2519 = vsel %vm2487, 1, 0
        %v2520 = vsel %vm2488, 1, 0
        %v2521 = vsel %vm2489, 1, 0
        %v2522 = vsel %vm2490, 1, 0
        %v2523 = vcvt.s32.f32 %v2491
        %v2524 = vcvt.s32.f32 %v2492
        %v2525 = vcvt.s32.f32 %v2493
        %v2526 = vcvt.s32.f32 %v2494
        %v2527 = vcvt.s32.f32 %v2495
        %v2528 = vcvt.s32.f32 %v2496
        %v2529 = vcvt.s32.f32 %v2497
        %v2530 = vcvt.s32.f32 %v2498
        %v2531 = vcvt.s32.f32 %v2499
        %v2532 = vcvt.s32.f32 %v2500
        %v2533 = vcvt.s32.f32 %v2501
        %v2534 = vcvt.s32.f32 %v2502
        %v2535 = vcvt.s32.f32 %v2503
        %v2536 = vcvt.s32.f32 %v2504
        %v2537 = vcvt.s32.f32 %v2505
        %v2538 = vcvt.s32.f32 %v2506
        %v2539 = vcvt.s32.f32 %v2507
        %v2540 = vcvt.s32.f32 %v2508
        %v2541 = vcvt.s32.f32 %v2509
        %v2542 = vcvt.s32.f32 %v2510
        %v2543 = vcvt.s32.f32 %v2511
        %v2544 = vcvt.s32.f32 %v2512
        %v2545 = vcvt.s32.f32 %v2513
        %v2546 = vcvt.s32.f32 %v2514
        %v2547 = vcvt.s32.f32 %v2515
        %v2548 = vcvt.s32.f32 %v2516
        %v2549 = vcvt.s32.f32 %v2517
        %v2550 = vcvt.s32.f32 %v2518
        %v2551 = vcvt.s32.f32 %v2519
        %v2552 = vcvt.s32.f32 %v2520
        %v2553 = vcvt.s32.f32 %v2521
        %v2554 = vcvt.s32.f32 %v2522
        %v2556 = vsel %vm772, %v2523, 0
        %v2559 = vsel %vm772, %v2524, 0
        %v2562 = vsel %vm772, %v2525, 0
        %v2565 = vsel %vm772, %v2526, 0
        %v2568 = vsel %vm772, %v2527, 0
        %v2571 = vsel %vm772, %v2528, 0
        %v2574 = vsel %vm772, %v2529, 0
        %v2577 = vsel %vm772, %v2530, 0
        %v2580 = vsel %vm772, %v2531, 0
        %v2583 = vsel %vm772, %v2532, 0
        %v2586 = vsel %vm772, %v2533, 0
        %v2589 = vsel %vm772, %v2534, 0
        %v2592 = vsel %vm772, %v2535, 0
        %v2595 = vsel %vm772, %v2536, 0
        %v2598 = vsel %vm772, %v2537, 0
        %v2601 = vsel %vm772, %v2538, 0
        %v2604 = vsel %vm772, %v2539, 0
        %v2607 = vsel %vm772, %v2540, 0
        %v2610 = vsel %vm772, %v2541, 0
        %v2613 = vsel %vm772, %v2542, 0
        %v2616 = vsel %vm772, %v2543, 0
        %v2619 = vsel %vm772, %v2544, 0
        %v2622 = vsel %vm772, %v2545, 0
        %v2625 = vsel %vm772, %v2546, 0
        %v2628 = vsel %vm772, %v2547, 0
        %v2631 = vsel %vm772, %v2548, 0
        %v2634 = vsel %vm772, %v2549, 0
        %v2637 = vsel %vm772, %v2550, 0
        %v2640 = vsel %vm772, %v2551, 0
        %v2643 = vsel %vm772, %v2552, 0
        %v2646 = vsel %vm772, %v2553, 0
        %v2649 = vsel %vm772, %v2554, 0
        %2651 = vmatpush.msra.mxu0 0.0
        %2652 = vmatpush.msra.mxu0 0.0
        %2653 = vmatpush.msra.mxu0 0.0
        %2654 = vmatpush.msra.mxu0 0.0
        %2655 = vmatpush.msra.mxu0 0.0
        %2656 = vmatpush.msra.mxu0 0.0
        %2657 = vmatpush.msra.mxu0 0.0
        %2658 = vmatpush.msra.mxu0 0.0
        %2659 = vmatpush.msra.mxu0 %v309
        %2660 = vmatpush.msra.mxu0 %v308
        %2661 = vmatpush.msra.mxu0 %v307
        %2662 = vmatpush.msra.mxu0 %v306
        %2663 = vmatpush.msra.mxu0 %v305
        %2664 = vmatpush.msra.mxu0 %v304
        %2665 = vmatpush.msra.mxu0 %v303
        %2666 = vmatpush.msra.mxu0 %v302
        %2667 = vmatmul.f32.gmra.mxu0 %v2556
        %v2668 = vpop.f32.mrf.mxu0
        %v2669 = vadd.f32 0.0, %v2668
        %2670 = vmatmul.f32.gmra.mxu0 %v2559
        %v2671 = vpop.f32.mrf.mxu0
        %v2672 = vadd.f32 0.0, %v2671
        %2673 = vmatmul.f32.gmra.mxu0 %v2562
        %v2674 = vpop.f32.mrf.mxu0
        %v2675 = vadd.f32 0.0, %v2674
        %2676 = vmatmul.f32.gmra.mxu0 %v2565
        %v2677 = vpop.f32.mrf.mxu0
        %v2678 = vadd.f32 0.0, %v2677
        %2679 = vmatmul.f32.gmra.mxu0 %v2568
        %v2680 = vpop.f32.mrf.mxu0
        %v2681 = vadd.f32 0.0, %v2680
        %2682 = vmatmul.f32.gmra.mxu0 %v2571
        %v2683 = vpop.f32.mrf.mxu0
        %v2684 = vadd.f32 0.0, %v2683
        %2685 = vmatmul.f32.gmra.mxu0 %v2574
        %v2686 = vpop.f32.mrf.mxu0
        %v2687 = vadd.f32 0.0, %v2686
        %2688 = vmatmul.f32.gmra.mxu0 %v2577
        %v2689 = vpop.f32.mrf.mxu0
        %v2690 = vadd.f32 0.0, %v2689
        %2691 = vmatmul.f32.gmra.mxu0 %v2580
        %v2692 = vpop.f32.mrf.mxu0
        %v2693 = vadd.f32 0.0, %v2692
        %2694 = vmatmul.f32.gmra.mxu0 %v2583
        %v2695 = vpop.f32.mrf.mxu0
        %v2696 = vadd.f32 0.0, %v2695
        %2697 = vmatmul.f32.gmra.mxu0 %v2586
        %v2698 = vpop.f32.mrf.mxu0
        %v2699 = vadd.f32 0.0, %v2698
        %2700 = vmatmul.f32.gmra.mxu0 %v2589
        %v2701 = vpop.f32.mrf.mxu0
        %v2702 = vadd.f32 0.0, %v2701
        %2703 = vmatmul.f32.gmra.mxu0 %v2592
        %v2704 = vpop.f32.mrf.mxu0
        %v2705 = vadd.f32 0.0, %v2704
        %2706 = vmatmul.f32.gmra.mxu0 %v2595
        %v2707 = vpop.f32.mrf.mxu0
        %v2708 = vadd.f32 0.0, %v2707
        %2709 = vmatmul.f32.gmra.mxu0 %v2598
        %v2710 = vpop.f32.mrf.mxu0
        %v2711 = vadd.f32 0.0, %v2710
        %2712 = vmatmul.f32.gmra.mxu0 %v2601
        %v2713 = vpop.f32.mrf.mxu0
        %v2714 = vadd.f32 0.0, %v2713
        %2715 = vmatmul.f32.gmra.mxu0 %v2604
        %v2716 = vpop.f32.mrf.mxu0
        %v2717 = vadd.f32 0.0, %v2716
        %2718 = vmatmul.f32.gmra.mxu0 %v2607
        %v2719 = vpop.f32.mrf.mxu0
        %v2720 = vadd.f32 0.0, %v2719
        %2721 = vmatmul.f32.gmra.mxu0 %v2610
        %v2722 = vpop.f32.mrf.mxu0
        %v2723 = vadd.f32 0.0, %v2722
        %2724 = vmatmul.f32.gmra.mxu0 %v2613
        %v2725 = vpop.f32.mrf.mxu0
        %v2726 = vadd.f32 0.0, %v2725
        %2727 = vmatmul.f32.gmra.mxu0 %v2616
        %v2728 = vpop.f32.mrf.mxu0
        %v2729 = vadd.f32 0.0, %v2728
        %2730 = vmatmul.f32.gmra.mxu0 %v2619
        %v2731 = vpop.f32.mrf.mxu0
        %v2732 = vadd.f32 0.0, %v2731
        %2733 = vmatmul.f32.gmra.mxu0 %v2622
        %v2734 = vpop.f32.mrf.mxu0
        %v2735 = vadd.f32 0.0, %v2734
        %2736 = vmatmul.f32.gmra.mxu0 %v2625
        %v2737 = vpop.f32.mrf.mxu0
        %v2738 = vadd.f32 0.0, %v2737
        %2739 = vmatmul.f32.gmra.mxu0 %v2628
        %v2740 = vpop.f32.mrf.mxu0
        %v2741 = vadd.f32 0.0, %v2740
        %2742 = vmatmul.f32.gmra.mxu0 %v2631
        %v2743 = vpop.f32.mrf.mxu0
        %v2744 = vadd.f32 0.0, %v2743
        %2745 = vmatmul.f32.gmra.mxu0 %v2634
        %v2746 = vpop.f32.mrf.mxu0
        %v2747 = vadd.f32 0.0, %v2746
        %2748 = vmatmul.f32.gmra.mxu0 %v2637
        %v2749 = vpop.f32.mrf.mxu0
        %v2750 = vadd.f32 0.0, %v2749
        %2751 = vmatmul.f32.gmra.mxu0 %v2640
        %v2752 = vpop.f32.mrf.mxu0
        %v2753 = vadd.f32 0.0, %v2752
        %2754 = vmatmul.f32.gmra.mxu0 %v2643
        %v2755 = vpop.f32.mrf.mxu0
        %v2756 = vadd.f32 0.0, %v2755
        %2757 = vmatmul.f32.gmra.mxu0 %v2646
        %v2758 = vpop.f32.mrf.mxu0
        %v2759 = vadd.f32 0.0, %v2758
        %2760 = vmatmul.f32.gmra.mxu0 %v2649
        %v2761 = vpop.f32.mrf.mxu0
        %v2762 = vadd.f32 0.0, %v2761
        %2763 = vdwg.mxu0
        %2764 = vst.msk [vmem:[%s248] sm:$0xff] %vm343, %v2669
        %2765 = vst.msk [vmem:[%s248 + $0x8] sm:$0xff] %vm343, %v2672
        %2766 = vst.msk [vmem:[%s248 + $0x10] sm:$0xff] %vm343, %v2675
        %2767 = vst.msk [vmem:[%s248 + $0x18] sm:$0xff] %vm343, %v2678
        %2768 = vst.msk [vmem:[%s248 + $0x20] sm:$0xff] %vm343, %v2681
        %2769 = vst.msk [vmem:[%s248 + $0x28] sm:$0xff] %vm343, %v2684
        %2770 = vst.msk [vmem:[%s248 + $0x30] sm:$0xff] %vm343, %v2687
        %2771 = vst.msk [vmem:[%s248 + $0x38] sm:$0xff] %vm343, %v2690
        %2772 = vst.msk [vmem:[%s248 + $0x40] sm:$0xff] %vm343, %v2693
        %2773 = vst.msk [vmem:[%s248 + $0x48] sm:$0xff] %vm343, %v2696
        %2774 = vst.msk [vmem:[%s248 + $0x50] sm:$0xff] %vm343, %v2699
        %2775 = vst.msk [vmem:[%s248 + $0x58] sm:$0xff] %vm343, %v2702
        %2776 = vst.msk [vmem:[%s248 + $0x60] sm:$0xff] %vm343, %v2705
        %2777 = vst.msk [vmem:[%s248 + $0x68] sm:$0xff] %vm343, %v2708
        %2778 = vst.msk [vmem:[%s248 + $0x70] sm:$0xff] %vm343, %v2711
        %2779 = vst.msk [vmem:[%s248 + $0x78] sm:$0xff] %vm343, %v2714
        %2780 = vst.msk [vmem:[%s248 + $0x80] sm:$0xff] %vm343, %v2717
        %2781 = vst.msk [vmem:[%s248 + $0x88] sm:$0xff] %vm343, %v2720
        %2782 = vst.msk [vmem:[%s248 + $0x90] sm:$0xff] %vm343, %v2723
        %2783 = vst.msk [vmem:[%s248 + $0x98] sm:$0xff] %vm343, %v2726
        %2784 = vst.msk [vmem:[%s248 + $0xa0] sm:$0xff] %vm343, %v2729
        %2785 = vst.msk [vmem:[%s248 + $0xa8] sm:$0xff] %vm343, %v2732
        %2786 = vst.msk [vmem:[%s248 + $0xb0] sm:$0xff] %vm343, %v2735
        %2787 = vst.msk [vmem:[%s248 + $0xb8] sm:$0xff] %vm343, %v2738
        %2788 = vst.msk [vmem:[%s248 + $0xc0] sm:$0xff] %vm343, %v2741
        %2789 = vst.msk [vmem:[%s248 + $0xc8] sm:$0xff] %vm343, %v2744
        %2790 = vst.msk [vmem:[%s248 + $0xd0] sm:$0xff] %vm343, %v2747
        %2791 = vst.msk [vmem:[%s248 + $0xd8] sm:$0xff] %vm343, %v2750
        %2792 = vst.msk [vmem:[%s248 + $0xe0] sm:$0xff] %vm343, %v2753
        %2793 = vst.msk [vmem:[%s248 + $0xe8] sm:$0xff] %vm343, %v2756
        %2794 = vst.msk [vmem:[%s248 + $0xf0] sm:$0xff] %vm343, %v2759
        %2795 = vst.msk [vmem:[%s248 + $0xf8] sm:$0xff] %vm343, %v2762
        %s2796 = sand.u32 %s102, 1
        %s2797 = scalar_lea.sflag [#allocation4], %s2796
        %s2798 = sand.u32 %s102, 1
        %s2799 = smul.addr %s2798, 256
        %s2800 = scalar_lea.vmem [#allocation5], %s2799
        %s2801 = sand.u32 %s128, 1
        %s2802 = scalar_lea.sflag [#allocation7], %s2801
        %s2803 = sand.u32 %s128, 1
        %s2804 = smul.addr %s2803, 2
        %s2805 = scalar_lea.vmem [#allocation6], %s2804
        %s2806 = smul.u32 2, %s26
        %p2807 = scmp.lt.s32.totalorder %s2806, 3
        %s2808 = scalar_select %p2807, %s2806, 3
        %s2809 = scalar_lea.vmem %s5, %s2808
        // Predicated region
        $region37: #{vector_quantizer_forward.1} parent=31 // pred_check
          %p2810 = pneg %p112
        $region38: #{vector_quantizer_forward.1} parent=31 // pred_check_branch
          %2812 = sbr.rel (%p2810) target = $region40
        $region39: #{vector_quantizer_forward.1} parent=31 // pred_region
          %s2813 = smul.u32 32, %s26
          %2815 = vsyncadd %s2797, 0
          %s2816 = smul.addr %s2813, 8
          %s2817 = scalar_lea.hbm %s3, %s2816
          %s2818 = sshll.u32 %s2800, 4
          %s2819 = int_to_ptr.vmem [resolvable:$true] %s2818
          %s2820 = sshll.u32 %s2817, 4
          %s2821 = int_to_ptr.hbm [resolvable:$true] %s2820
          %2826 = dma.vmem_to_hbm [thread:$0]  %s2819, 4096, %s2821, %s2797, 128, 128, 8
        $region40: #{vector_quantizer_forward.1} parent=31 // pred_fallthru
          _
        // Predicated region
        $region41: #{vector_quantizer_forward.1} parent=31 // pred_check
          %p2827 = pneg %p138
        $region42: #{vector_quantizer_forward.1} parent=31 // pred_check_branch
          %2829 = sbr.rel (%p2827) target = $region44
        $region43: #{vector_quantizer_forward.1} parent=31 // pred_region
          %s2830 = smul.u32 2, %s26
          %2832 = vsyncadd %s2802, 0
          %s2833 = scalar_lea.hbm %s4, %s2830
          %s2835 = sshll.u32 %s2805, 4
          %s2836 = int_to_ptr.vmem [resolvable:$true] %s2835
          %s2837 = sshll.u32 %s2833, 4
          %s2838 = int_to_ptr.hbm [resolvable:$true] %s2837
          %2840 = dma.vmem_to_hbm [thread:$0]  %s2836, 32, %s2838, %s2802
        $region44: #{vector_quantizer_forward.1} parent=31 // pred_fallthru
          _
        // Predicated region
        $region45: #{vector_quantizer_forward.1} parent=31 // pred_check
          %p2841 = pneg %p164
        $region46: #{vector_quantizer_forward.1} parent=31 // pred_check_branch
          %2843 = sbr.rel (%p2841) target = $region48
        $region47: #{vector_quantizer_forward.1} parent=31 // pred_region
          %s2844 = smul.u32 2, %s26
        $region48: #{vector_quantizer_forward.1} parent=31 // pred_fallthru
          _
      $region32: #{vector_quantizer_forward.1} parent=5 // pred_fallthru
        _
      %p2845 = scmp.le.s32.totalorder 2, %s21
      // Predicated region
      $region49: #{vector_quantizer_forward.1} parent=5 // pred_check
        %p2846 = pneg %p2845
      $region50: #{vector_quantizer_forward.1} parent=5 // pred_check_branch
        %2848 = sbr.rel (%p2846) target = $region52
      $region51: #{vector_quantizer_forward.1} parent=5 // pred_region
        %s2849 = ssub.s32 %s21, 2
        // Predicated region
        $region53: #{vector_quantizer_forward.1} parent=51 // pred_check
          %p2850 = pneg %p118
        $region54: #{vector_quantizer_forward.1} parent=51 // pred_check_branch
          %2852 = sbr.rel (%p2850) target = $region56
        $region55: #{vector_quantizer_forward.1} parent=51 // pred_region
          %s2853 = sand.u32 %s103, 1
          %s2854 = scalar_lea.sflag [#allocation4], %s2853
          %s2855 = sand.u32 %s103, 1
          %s2856 = smul.addr %s2855, 256
          %s2857 = scalar_lea.vmem [#allocation5], %s2856
          %2859 = dma.done %s2854, 4096
        $region56: #{vector_quantizer_forward.1} parent=51 // pred_fallthru
          _
        // Predicated region
        $region57: #{vector_quantizer_forward.1} parent=51 // pred_check
          %p2860 = pneg %p144
        $region58: #{vector_quantizer_forward.1} parent=51 // pred_check_branch
          %2862 = sbr.rel (%p2860) target = $region60
        $region59: #{vector_quantizer_forward.1} parent=51 // pred_region
          %s2863 = sand.u32 %s129, 1
          %s2864 = scalar_lea.sflag [#allocation7], %s2863
          %s2865 = sand.u32 %s129, 1
          %s2866 = smul.addr %s2865, 2
          %s2867 = scalar_lea.vmem [#allocation6], %s2866
          %2869 = dma.done %s2864, 32
        $region60: #{vector_quantizer_forward.1} parent=51 // pred_fallthru
          _
        // Predicated region
        $region61: #{vector_quantizer_forward.1} parent=51 // pred_check
          %p2870 = pneg %p170
        $region62: #{vector_quantizer_forward.1} parent=51 // pred_check_branch
          %2872 = sbr.rel (%p2870) target = $region64
        $region63: #{vector_quantizer_forward.1} parent=51 // pred_region
          %s2873 = smul.u32 2, %s27
          %p2874 = scmp.lt.s32.totalorder %s2873, 3
          %s2875 = scalar_select %p2874, %s2873, 3
          %s2876 = scalar_lea.vmem %s5, %s2875
        $region64: #{vector_quantizer_forward.1} parent=51 // pred_fallthru
          _
      $region52: #{vector_quantizer_forward.1} parent=5 // pred_fallthru
        _
    $region6: #{vector_quantizer_forward.1} parent=1 // loop_footer
      %s25 = sadd.s32 1, %s21
    $region7: #{vector_quantizer_forward.1} parent=1 // loop_footer_branch
      %20 = sbr.rel target = $region3
    $region8: #{vector_quantizer_forward.1} parent=1 // loop_exit
      _
    %2877 = vsyncpa [#allocation3], 1
    %s2878 = scalar_lea.sflag [#allocation3], 1
    %2879 = vsyncpa %s2878, 1
    %2880 = vsyncpa [#allocation4], 1
    %s2881 = scalar_lea.sflag [#allocation4], 1
    %2882 = vsyncpa %s2881, 1
    %2883 = vsyncpa [#allocation7], 1
    %s2884 = scalar_lea.sflag [#allocation7], 1
    %2885 = vsyncpa %s2884, 1

</llo_original>
